<compile_context>
chip_gen: v5e
topology: v5e:2x2
jax: 0.10.0
libtpu: 0.0.40
codegen_flags: <defaults>
</compile_context>

<pallas_src>
import functools

import jax
import jax.numpy as jnp
from jax.experimental import pallas as pl
from jax.experimental.pallas import tpu as pltpu


EPS = 1e-5
_LANE = 128


def _round_up(n, m):
    return ((n + m - 1) // m) * m


@functools.lru_cache(maxsize=1)
def _vmem_budget_bytes():
    """~85% of physical per-TC VMEM (>=8 MiB headroom); safe fallback 64 MiB."""
    phys = 64 << 20
    try:
        info = pltpu.get_tpu_info()
        phys = int(getattr(info, "vmem_capacity_bytes", phys))
    except Exception:
        pass
    return max(min(int(phys * 0.85), phys - (8 << 20)), 16 << 20)


def critic_kernel(input_dims,
                  xa_ref,
                  g0_ref, be0_ref,
                  w1_ref, g1_ref, be1_ref,
                  w2_ref, g2_ref, be2_ref,
                  w3_ref, g3_ref, be3_ref,
                  w4_ref, b4_ref,
                  out_ref):
    # xa_ref: (B, K_PAD) f32 = [embedded features | action | zero pad]
    xa = xa_ref[...]
    inv_b = jnp.float32(1.0 / xa.shape[0])

    # ---- Layer-0 BN folded into per-lane scale/shift (x lanes only). ----
    mean0 = jnp.sum(xa, axis=0, keepdims=True) * inv_b               # (1, K)
    ex2_0 = jnp.sum(xa * xa, axis=0, keepdims=True) * inv_b          # (1, K)
    var0 = ex2_0 - mean0 * mean0
    lane = jax.lax.broadcasted_iota(jnp.int32, mean0.shape, 1)       # (1, K)
    is_x = lane < input_dims
    scale0 = jnp.where(is_x, g0_ref[...] * jax.lax.rsqrt(var0 + EPS), 1.0)
    shift0 = jnp.where(is_x, be0_ref[...] - mean0 * scale0, 0.0)
    # Single pass over (B, K): normalize x lanes, pass-through action/pad lanes,
    # cast straight to bf16 for the MXU.
    h_bf16 = (xa * scale0 + shift0).astype(jnp.bfloat16)

    def linear_bn_relu(h_in, w_ref, g_ref, be_ref):
        # Pre-BN bias dropped: constant column bias cancels under training BN.
        h = jnp.dot(h_in, w_ref[...], preferred_element_type=jnp.float32)
        m = jnp.sum(h, axis=0, keepdims=True) * inv_b                # (1, N)
        e2 = jnp.sum(h * h, axis=0, keepdims=True) * inv_b
        sc = g_ref[...] * jax.lax.rsqrt(e2 - m * m + EPS)            # (1, N)
        sh = be_ref[...] - m * sc                                    # (1, N)
        # One fused pass: scale/shift + ReLU + bf16 cast.
        return jnp.maximum(h * sc + sh, 0.0).astype(jnp.bfloat16)

    h_bf16 = linear_bn_relu(h_bf16, w1_ref, g1_ref, be1_ref)
    h_bf16 = linear_bn_relu(h_bf16, w2_ref, g2_ref, be2_ref)
    h_bf16 = linear_bn_relu(h_bf16, w3_ref, g3_ref, be3_ref)

    # Final Linear: output lanes padded to 128 -> lane-dense (unmasked) store.
    out_ref[...] = (jnp.dot(h_bf16, w4_ref[...],
                            preferred_element_type=jnp.float32)
                    + b4_ref[...])


def make_critic_params(key, input_dims, action_nums, feature_nums,
                       field_nums, latent_dims):
    """Raw (module-layout) parameters: weights as (fan_in, fan_out) f32."""
    assert input_dims == field_nums * latent_dims
    neuron_nums = [512, 512, 512]
    keys = jax.random.split(key, 20)

    def u(k, shape, lo=-0.1, hi=0.1):
        return jax.random.uniform(k, shape, jnp.float32, minval=lo, maxval=hi)

    p = {}
    p["emb_table"] = jax.random.normal(
        keys[0], (feature_nums, latent_dims), jnp.float32) * 0.1
    p["g0"] = u(keys[1], (1, input_dims), 0.5, 1.5)
    p["be0"] = u(keys[2], (1, input_dims))

    dims = [input_dims + action_nums] + neuron_nums
    ki = 3
    for i in range(3):
        p[f"w{i+1}"] = u(keys[ki], (dims[i], dims[i + 1])); ki += 1
        p[f"b{i+1}"] = u(keys[ki], (1, dims[i + 1])); ki += 1
        p[f"g{i+1}"] = u(keys[ki], (1, dims[i + 1]), 0.5, 1.5); ki += 1
        p[f"be{i+1}"] = u(keys[ki], (1, dims[i + 1])); ki += 1
    p["w4"] = u(keys[ki], (neuron_nums[-1], action_nums)); ki += 1
    p["b4"] = u(keys[ki], (1, action_nums))
    return p


def pack_critic_params(params):
    """Pre-pad / pre-cast parameters for the kernel.

    - W1 stored as one (K_PAD, 512) matrix (K padded to a lane multiple).
    - W4 / b4 lane-padded so the output store is >= 128 lanes wide.
    - Matmul weights bf16 (half the DMA bytes); BN affine params stay f32.
    - b1..b3 intentionally not packed: pre-BN biases cancel exactly.
    """
    input_dims = params["g0"].shape[1]
    d_in, n1 = params["w1"].shape
    n3, n_out = params["w4"].shape
    k_pad = _round_up(max(d_in, _LANE), _LANE)
    n_out_pad = _round_up(max(n_out, _LANE), _LANE)

    w1_pad = jnp.zeros((k_pad, n1), jnp.float32).at[:d_in, :].set(params["w1"])
    g0_pad = jnp.ones((1, k_pad), jnp.float32).at[:, :input_dims].set(params["g0"])
    be0_pad = jnp.zeros((1, k_pad), jnp.float32).at[:, :input_dims].set(params["be0"])
    w4_pad = jnp.zeros((n3, n_out_pad), jnp.float32).at[:, :n_out].set(params["w4"])
    b4_pad = jnp.zeros((1, n_out_pad), jnp.float32).at[:, :n_out].set(params["b4"])

    return {
        "emb_table": params["emb_table"],
        "g0": g0_pad, "be0": be0_pad,
        "w1": w1_pad.astype(jnp.bfloat16),
        "g1": params["g1"], "be1": params["be1"],
        "w2": params["w2"].astype(jnp.bfloat16),
        "g2": params["g2"], "be2": params["be2"],
        "w3": params["w3"].astype(jnp.bfloat16),
        "g3": params["g3"], "be3": params["be3"],
        "w4": w4_pad.astype(jnp.bfloat16),
        "b4": b4_pad,
    }


@jax.jit
def critic_forward(packed, feat_idx, action):
    """feat_idx: int32 (B, field_nums); action: float (B, action_nums).

    jit-ed so the embedding gather + reshape + concat + pallas_call collapse
    into a single XLA dispatch with one fused xa producer.
    """
    B = feat_idx.shape[0]
    if B % 8 != 0:
        raise ValueError("batch must be a multiple of 8 sublanes "
                         "(multiples of 16 preferred for bf16 packing)")

    # TODO(synk): fuse this gather in-kernel (scalar-prefetched feat_idx +
    # VMEM-resident emb_table) to remove the xa HBM round trip entirely.
    emb = jnp.take(packed["emb_table"], feat_idx, axis=0)        # (B, F, L)
    x = emb.reshape(B, -1).astype(jnp.float32)                   # (B, input_dims)
    input_dims = x.shape[1]
    action_nums = action.shape[1]

    k_pad = packed["w1"].shape[0]
    n_out_pad = packed["w4"].shape[1]
    n_hidden = packed["w2"].shape[0]

    # Lane-padded fused LHS as a single concatenate: [x | action | zeros].
    parts = [x, action.astype(jnp.float32)]
    pad_w = k_pad - input_dims - action_nums
    if pad_w > 0:
        parts.append(jnp.zeros((B, pad_w), jnp.float32))
    xa = jnp.concatenate(parts, axis=1)                          # (B, k_pad)

    kernel_inputs = (
        xa,
        packed["g0"], packed["be0"],
        packed["w1"], packed["g1"], packed["be1"],
        packed["w2"], packed["g2"], packed["be2"],
        packed["w3"], packed["g3"], packed["be3"],
        packed["w4"], packed["b4"],
    )

    # Generation-aware VMEM budget.  Grid-less whole-array specs are
    # single-buffered, so inputs count once.
    in_bytes = sum(int(a.size) * a.dtype.itemsize for a in kernel_inputs)
    out_bytes = B * n_out_pad * 4
    live_act_bytes = B * 4 * (k_pad + 4 * n_hidden)
    vmem_est = in_bytes + out_bytes + live_act_bytes + (4 << 20)
    budget = _vmem_budget_bytes()
    if vmem_est > budget:
        # TODO(synk): batch-tiled two-phase-BN path (grid over batch tiles,
        # sum/sumsq accumulated in VMEM scratch) for batches beyond this.
        raise ValueError("batch too large for the single-shot VMEM-resident "
                         "kernel on this TPU generation")
    vmem_limit = int(min(max(vmem_est, 16 << 20), budget))

    vmem = pl.BlockSpec(memory_space=pltpu.MemorySpace.VMEM)
    out = pl.pallas_call(
        functools.partial(critic_kernel, input_dims),
        out_shape=jax.ShapeDtypeStruct((B, n_out_pad), jnp.float32),
        in_specs=[vmem] * len(kernel_inputs),
        out_specs=vmem,
        compiler_params=pltpu.CompilerParams(vmem_limit_bytes=vmem_limit),
    )(*kernel_inputs)
    return out[:, :action_nums]


def critic_reference(params, feat_idx, action):
    """Pure-JAX reference mirroring the PyTorch module structure exactly
    (cat, full W1, biases b1..b3 included, two-pass BN) with the same MXU
    numerics as the kernel: bf16 matmul operands, f32 accumulation, f32 BN."""
    def bn(h, gamma, beta):
        mean = jnp.mean(h, axis=0, keepdims=True)
        var = jnp.mean(jnp.square(h - mean), axis=0, keepdims=True)
        return (h - mean) * jax.lax.rsqrt(var + EPS) * gamma + beta

    def dot16(a, w):
        return jnp.dot(a.astype(jnp.bfloat16), w.astype(jnp.bfloat16),
                       preferred_element_type=jnp.float32)

    B = feat_idx.shape[0]
    x = jnp.take(params["emb_table"], feat_idx, axis=0).reshape(B, -1)
    x = bn(x, params["g0"], params["be0"])
    cat = jnp.concatenate([x, action.astype(jnp.float32)], axis=1)
    h = dot16(cat, params["w1"]) + params["b1"]   # b1..b3 cancel under BN
    h = jnp.maximum(bn(h, params["g1"], params["be1"]), 0.0)
    h = dot16(h, params["w2"]) + params["b2"]
    h = jnp.maximum(bn(h, params["g2"], params["be2"]), 0.0)
    h = dot16(h, params["w3"]) + params["b3"]
    h = jnp.maximum(bn(h, params["g3"], params["be3"]), 0.0)
    return dot16(h, params["w4"]) + params["b4"]


if __name__ == "__main__":
    # Small, module-consistent shapes (batch multiple of 16 for bf16 packing).
    batch = 16
    feature_nums = 64
    field_nums = 4
    latent_dims = 8
    input_dims = field_nums * latent_dims   # 32
    action_nums = 4

    key = jax.random.PRNGKey(0)
    k_param, k_feat, k_act = jax.random.split(key, 3)

    params = make_critic_params(k_param, input_dims, action_nums,
                                feature_nums, field_nums, latent_dims)
    packed = pack_critic_params(params)

    feat_idx = jax.random.randint(k_feat, (batch, field_nums), 0, feature_nums,
                                  dtype=jnp.int32)
    action = jax.random.normal(k_act, (batch, action_nums), jnp.float32)

    q_out = critic_forward(packed, feat_idx, action)
    q_out = jax.block_until_ready(q_out)

    q_ref = critic_reference(params, feat_idx, action)
    assert q_out.shape == (batch, action_nums)
    assert jnp.allclose(q_out, q_ref, atol=2e-2, rtol=2e-2), \
        float(jnp.max(jnp.abs(q_out - q_ref)))

    print("KERNEL_OK")
</pallas_src>

<mosaic_0001>
module attributes {stable_mosaic.version = 11 : i64} {
  func.func @critic_kernel(%arg0: memref<16x128xf32, #tpu.memory_space<vmem>>, %arg1: memref<1x128xf32, #tpu.memory_space<vmem>>, %arg2: memref<1x128xf32, #tpu.memory_space<vmem>>, %arg3: memref<128x512xbf16, #tpu.memory_space<vmem>>, %arg4: memref<1x512xf32, #tpu.memory_space<vmem>>, %arg5: memref<1x512xf32, #tpu.memory_space<vmem>>, %arg6: memref<512x512xbf16, #tpu.memory_space<vmem>>, %arg7: memref<1x512xf32, #tpu.memory_space<vmem>>, %arg8: memref<1x512xf32, #tpu.memory_space<vmem>>, %arg9: memref<512x512xbf16, #tpu.memory_space<vmem>>, %arg10: memref<1x512xf32, #tpu.memory_space<vmem>>, %arg11: memref<1x512xf32, #tpu.memory_space<vmem>>, %arg12: memref<512x128xbf16, #tpu.memory_space<vmem>>, %arg13: memref<1x128xf32, #tpu.memory_space<vmem>>, %arg14: memref<16x128xf32, #tpu.memory_space<vmem>>) attributes {dimension_semantics = [], scalar_prefetch = 0 : i64, scratch_operands = 0 : i64, tpu.core_type = #tpu.core_type<tc>} {
    %c0 = arith.constant 0 : index
    %c0_0 = arith.constant 0 : index
    %0 = vector.load %arg0[%c0, %c0_0] : memref<16x128xf32, #tpu.memory_space<vmem>>, vector<16x128xf32>
    %cst = arith.constant dense<0.000000e+00> : vector<128xf32>
    %1 = vector.multi_reduction <add>, %0, %cst [0] : vector<16x128xf32> to vector<128xf32>
    %2 = vector.shape_cast %1 : vector<128xf32> to vector<1x128xf32>
    %cst_1 = arith.constant 6.250000e-02 : f32
    %3 = vector.broadcast %cst_1 : f32 to vector<1x128xf32>
    %4 = arith.mulf %2, %3 : vector<1x128xf32>
    %5 = arith.mulf %0, %0 : vector<16x128xf32>
    %cst_2 = arith.constant dense<0.000000e+00> : vector<128xf32>
    %6 = vector.multi_reduction <add>, %5, %cst_2 [0] : vector<16x128xf32> to vector<128xf32>
    %7 = vector.shape_cast %6 : vector<128xf32> to vector<1x128xf32>
    %cst_3 = arith.constant 6.250000e-02 : f32
    %8 = vector.broadcast %cst_3 : f32 to vector<1x128xf32>
    %9 = arith.mulf %7, %8 : vector<1x128xf32>
    %10 = arith.mulf %4, %4 : vector<1x128xf32>
    %11 = arith.subf %9, %10 : vector<1x128xf32>
    %12 = tpu.iota {dimensions = array<i32: 1>} : vector<1x128xi32>
    %c32_i32 = arith.constant 32 : i32
    %13 = vector.broadcast %c32_i32 : i32 to vector<1x128xi32>
    %14 = arith.cmpi slt, %12, %13 : vector<1x128xi32>
    %c0_4 = arith.constant 0 : index
    %c0_5 = arith.constant 0 : index
    %15 = vector.load %arg1[%c0_4, %c0_5] : memref<1x128xf32, #tpu.memory_space<vmem>>, vector<1x128xf32>
    %cst_6 = arith.constant 9.99999974E-6 : f32
    %16 = vector.broadcast %cst_6 : f32 to vector<1x128xf32>
    %17 = arith.addf %11, %16 : vector<1x128xf32>
    %18 = math.rsqrt %17 : vector<1x128xf32>
    %19 = arith.mulf %15, %18 : vector<1x128xf32>
    %cst_7 = arith.constant 1.000000e+00 : f32
    %20 = vector.broadcast %cst_7 : f32 to vector<1x128xf32>
    %21 = arith.select %14, %19, %20 : vector<1x128xi1>, vector<1x128xf32>
    %c0_8 = arith.constant 0 : index
    %c0_9 = arith.constant 0 : index
    %22 = vector.load %arg2[%c0_8, %c0_9] : memref<1x128xf32, #tpu.memory_space<vmem>>, vector<1x128xf32>
    %23 = arith.mulf %4, %21 : vector<1x128xf32>
    %24 = arith.subf %22, %23 : vector<1x128xf32>
    %cst_10 = arith.constant 0.000000e+00 : f32
    %25 = vector.broadcast %cst_10 : f32 to vector<1x128xf32>
    %26 = arith.select %14, %24, %25 : vector<1x128xi1>, vector<1x128xf32>
    %27 = vector.broadcast %21 : vector<1x128xf32> to vector<16x128xf32>
    %28 = arith.mulf %0, %27 : vector<16x128xf32>
    %29 = vector.broadcast %26 : vector<1x128xf32> to vector<16x128xf32>
    %30 = arith.addf %28, %29 : vector<16x128xf32>
    %31 = arith.truncf %30 : vector<16x128xf32> to vector<16x128xbf16>
    %c0_11 = arith.constant 0 : index
    %c0_12 = arith.constant 0 : index
    %32 = vector.load %arg3[%c0_11, %c0_12] : memref<128x512xbf16, #tpu.memory_space<vmem>>, vector<128x512xbf16>
    %cst_13 = arith.constant dense<0.000000e+00> : vector<16x512xf32>
    %33 = tpu.matmul %31, %32, %cst_13 {dimension_numbers = #tpu.dot_dimension_numbers<[1], [0], [0], [1], [0, 0, 1, 1], [], []>} : vector<16x128xbf16>, vector<128x512xbf16>, vector<16x512xf32> -> vector<16x512xf32>
    %cst_14 = arith.constant dense<0.000000e+00> : vector<512xf32>
    %34 = vector.multi_reduction <add>, %33, %cst_14 [0] : vector<16x512xf32> to vector<512xf32>
    %35 = vector.shape_cast %34 : vector<512xf32> to vector<1x512xf32>
    %cst_15 = arith.constant 6.250000e-02 : f32
    %36 = vector.broadcast %cst_15 : f32 to vector<1x512xf32>
    %37 = arith.mulf %35, %36 : vector<1x512xf32>
    %38 = arith.mulf %33, %33 : vector<16x512xf32>
    %cst_16 = arith.constant dense<0.000000e+00> : vector<512xf32>
    %39 = vector.multi_reduction <add>, %38, %cst_16 [0] : vector<16x512xf32> to vector<512xf32>
    %40 = vector.shape_cast %39 : vector<512xf32> to vector<1x512xf32>
    %cst_17 = arith.constant 6.250000e-02 : f32
    %41 = vector.broadcast %cst_17 : f32 to vector<1x512xf32>
    %42 = arith.mulf %40, %41 : vector<1x512xf32>
    %c0_18 = arith.constant 0 : index
    %c0_19 = arith.constant 0 : index
    %43 = vector.load %arg4[%c0_18, %c0_19] : memref<1x512xf32, #tpu.memory_space<vmem>>, vector<1x512xf32>
    %44 = arith.mulf %37, %37 : vector<1x512xf32>
    %45 = arith.subf %42, %44 : vector<1x512xf32>
    %cst_20 = arith.constant 9.99999974E-6 : f32
    %46 = vector.broadcast %cst_20 : f32 to vector<1x512xf32>
    %47 = arith.addf %45, %46 : vector<1x512xf32>
    %48 = math.rsqrt %47 : vector<1x512xf32>
    %49 = arith.mulf %43, %48 : vector<1x512xf32>
    %c0_21 = arith.constant 0 : index
    %c0_22 = arith.constant 0 : index
    %50 = vector.load %arg5[%c0_21, %c0_22] : memref<1x512xf32, #tpu.memory_space<vmem>>, vector<1x512xf32>
    %51 = arith.mulf %37, %49 : vector<1x512xf32>
    %52 = arith.subf %50, %51 : vector<1x512xf32>
    %53 = vector.broadcast %49 : vector<1x512xf32> to vector<16x512xf32>
    %54 = arith.mulf %33, %53 : vector<16x512xf32>
    %55 = vector.broadcast %52 : vector<1x512xf32> to vector<16x512xf32>
    %56 = arith.addf %54, %55 : vector<16x512xf32>
    %cst_23 = arith.constant 0.000000e+00 : f32
    %57 = vector.broadcast %cst_23 : f32 to vector<16x512xf32>
    %58 = arith.maximumf %56, %57 : vector<16x512xf32>
    %59 = arith.truncf %58 : vector<16x512xf32> to vector<16x512xbf16>
    %c0_24 = arith.constant 0 : index
    %c0_25 = arith.constant 0 : index
    %60 = vector.load %arg6[%c0_24, %c0_25] : memref<512x512xbf16, #tpu.memory_space<vmem>>, vector<512x512xbf16>
    %cst_26 = arith.constant dense<0.000000e+00> : vector<16x512xf32>
    %61 = tpu.matmul %59, %60, %cst_26 {dimension_numbers = #tpu.dot_dimension_numbers<[1], [0], [0], [1], [0, 0, 1, 1], [], []>} : vector<16x512xbf16>, vector<512x512xbf16>, vector<16x512xf32> -> vector<16x512xf32>
    %cst_27 = arith.constant dense<0.000000e+00> : vector<512xf32>
    %62 = vector.multi_reduction <add>, %61, %cst_27 [0] : vector<16x512xf32> to vector<512xf32>
    %63 = vector.shape_cast %62 : vector<512xf32> to vector<1x512xf32>
    %cst_28 = arith.constant 6.250000e-02 : f32
    %64 = vector.broadcast %cst_28 : f32 to vector<1x512xf32>
    %65 = arith.mulf %63, %64 : vector<1x512xf32>
    %66 = arith.mulf %61, %61 : vector<16x512xf32>
    %cst_29 = arith.constant dense<0.000000e+00> : vector<512xf32>
    %67 = vector.multi_reduction <add>, %66, %cst_29 [0] : vector<16x512xf32> to vector<512xf32>
    %68 = vector.shape_cast %67 : vector<512xf32> to vector<1x512xf32>
    %cst_30 = arith.constant 6.250000e-02 : f32
    %69 = vector.broadcast %cst_30 : f32 to vector<1x512xf32>
    %70 = arith.mulf %68, %69 : vector<1x512xf32>
    %c0_31 = arith.constant 0 : index
    %c0_32 = arith.constant 0 : index
    %71 = vector.load %arg7[%c0_31, %c0_32] : memref<1x512xf32, #tpu.memory_space<vmem>>, vector<1x512xf32>
    %72 = arith.mulf %65, %65 : vector<1x512xf32>
    %73 = arith.subf %70, %72 : vector<1x512xf32>
    %cst_33 = arith.constant 9.99999974E-6 : f32
    %74 = vector.broadcast %cst_33 : f32 to vector<1x512xf32>
    %75 = arith.addf %73, %74 : vector<1x512xf32>
    %76 = math.rsqrt %75 : vector<1x512xf32>
    %77 = arith.mulf %71, %76 : vector<1x512xf32>
    %c0_34 = arith.constant 0 : index
    %c0_35 = arith.constant 0 : index
    %78 = vector.load %arg8[%c0_34, %c0_35] : memref<1x512xf32, #tpu.memory_space<vmem>>, vector<1x512xf32>
    %79 = arith.mulf %65, %77 : vector<1x512xf32>
    %80 = arith.subf %78, %79 : vector<1x512xf32>
    %81 = vector.broadcast %77 : vector<1x512xf32> to vector<16x512xf32>
    %82 = arith.mulf %61, %81 : vector<16x512xf32>
    %83 = vector.broadcast %80 : vector<1x512xf32> to vector<16x512xf32>
    %84 = arith.addf %82, %83 : vector<16x512xf32>
    %cst_36 = arith.constant 0.000000e+00 : f32
    %85 = vector.broadcast %cst_36 : f32 to vector<16x512xf32>
    %86 = arith.maximumf %84, %85 : vector<16x512xf32>
    %87 = arith.truncf %86 : vector<16x512xf32> to vector<16x512xbf16>
    %c0_37 = arith.constant 0 : index
    %c0_38 = arith.constant 0 : index
    %88 = vector.load %arg9[%c0_37, %c0_38] : memref<512x512xbf16, #tpu.memory_space<vmem>>, vector<512x512xbf16>
    %cst_39 = arith.constant dense<0.000000e+00> : vector<16x512xf32>
    %89 = tpu.matmul %87, %88, %cst_39 {dimension_numbers = #tpu.dot_dimension_numbers<[1], [0], [0], [1], [0, 0, 1, 1], [], []>} : vector<16x512xbf16>, vector<512x512xbf16>, vector<16x512xf32> -> vector<16x512xf32>
    %cst_40 = arith.constant dense<0.000000e+00> : vector<512xf32>
    %90 = vector.multi_reduction <add>, %89, %cst_40 [0] : vector<16x512xf32> to vector<512xf32>
    %91 = vector.shape_cast %90 : vector<512xf32> to vector<1x512xf32>
    %cst_41 = arith.constant 6.250000e-02 : f32
    %92 = vector.broadcast %cst_41 : f32 to vector<1x512xf32>
    %93 = arith.mulf %91, %92 : vector<1x512xf32>
    %94 = arith.mulf %89, %89 : vector<16x512xf32>
    %cst_42 = arith.constant dense<0.000000e+00> : vector<512xf32>
    %95 = vector.multi_reduction <add>, %94, %cst_42 [0] : vector<16x512xf32> to vector<512xf32>
    %96 = vector.shape_cast %95 : vector<512xf32> to vector<1x512xf32>
    %cst_43 = arith.constant 6.250000e-02 : f32
    %97 = vector.broadcast %cst_43 : f32 to vector<1x512xf32>
    %98 = arith.mulf %96, %97 : vector<1x512xf32>
    %c0_44 = arith.constant 0 : index
    %c0_45 = arith.constant 0 : index
    %99 = vector.load %arg10[%c0_44, %c0_45] : memref<1x512xf32, #tpu.memory_space<vmem>>, vector<1x512xf32>
    %100 = arith.mulf %93, %93 : vector<1x512xf32>
    %101 = arith.subf %98, %100 : vector<1x512xf32>
    %cst_46 = arith.constant 9.99999974E-6 : f32
    %102 = vector.broadcast %cst_46 : f32 to vector<1x512xf32>
    %103 = arith.addf %101, %102 : vector<1x512xf32>
    %104 = math.rsqrt %103 : vector<1x512xf32>
    %105 = arith.mulf %99, %104 : vector<1x512xf32>
    %c0_47 = arith.constant 0 : index
    %c0_48 = arith.constant 0 : index
    %106 = vector.load %arg11[%c0_47, %c0_48] : memref<1x512xf32, #tpu.memory_space<vmem>>, vector<1x512xf32>
    %107 = arith.mulf %93, %105 : vector<1x512xf32>
    %108 = arith.subf %106, %107 : vector<1x512xf32>
    %109 = vector.broadcast %105 : vector<1x512xf32> to vector<16x512xf32>
    %110 = arith.mulf %89, %109 : vector<16x512xf32>
    %111 = vector.broadcast %108 : vector<1x512xf32> to vector<16x512xf32>
    %112 = arith.addf %110, %111 : vector<16x512xf32>
    %cst_49 = arith.constant 0.000000e+00 : f32
    %113 = vector.broadcast %cst_49 : f32 to vector<16x512xf32>
    %114 = arith.maximumf %112, %113 : vector<16x512xf32>
    %115 = arith.truncf %114 : vector<16x512xf32> to vector<16x512xbf16>
    %c0_50 = arith.constant 0 : index
    %c0_51 = arith.constant 0 : index
    %116 = vector.load %arg12[%c0_50, %c0_51] : memref<512x128xbf16, #tpu.memory_space<vmem>>, vector<512x128xbf16>
    %cst_52 = arith.constant dense<0.000000e+00> : vector<16x128xf32>
    %117 = tpu.matmul %115, %116, %cst_52 {dimension_numbers = #tpu.dot_dimension_numbers<[1], [0], [0], [1], [0, 0, 1, 1], [], []>} : vector<16x512xbf16>, vector<512x128xbf16>, vector<16x128xf32> -> vector<16x128xf32>
    %c0_53 = arith.constant 0 : index
    %c0_54 = arith.constant 0 : index
    %118 = vector.load %arg13[%c0_53, %c0_54] : memref<1x128xf32, #tpu.memory_space<vmem>>, vector<1x128xf32>
    %119 = vector.broadcast %118 : vector<1x128xf32> to vector<16x128xf32>
    %120 = arith.addf %117, %119 : vector<16x128xf32>
    %c0_55 = arith.constant 0 : index
    %c0_56 = arith.constant 0 : index
    %121 = vector.load %arg14[%c0_55, %c0_56] : memref<16x128xf32, #tpu.memory_space<vmem>>, vector<16x128xf32>
    tpu.vector_store %arg14[%c0_55, %c0_56], %120 {strides = array<i32>} : memref<16x128xf32, #tpu.memory_space<vmem>>, vector<16x128xf32>,
    return
  }
}

</mosaic_0001>

<llo_original>
// kernel: critic_forward.1
$region0: #{critic_forward.1}
  #allocation0 [shape = 'u32[]', space=smem, size = 0x4, offset = 0x4, fixed_abs, tag = 'smem constant byte address 0x4 - core index']
  #allocation1 [shape = 'u32[72,128]{1,0:T(1,128)}', space=vmem, size = 0x9000, scoped, tag = 'internal scratch']
  %s0 = inlined_call_operand.vmem [shape: f32[16,128], index: 0, kind: input, shape index: {}]
  %s1 = inlined_call_operand.vmem [shape: f32[1,128], index: 1, kind: input, shape index: {}]
  %s2 = inlined_call_operand.vmem [shape: f32[1,128], index: 2, kind: input, shape index: {}]
  %s3 = inlined_call_operand.vmem [shape: bf16[128,512], index: 3, kind: input, shape index: {}]
  %s4 = inlined_call_operand.vmem [shape: f32[1,512], index: 4, kind: input, shape index: {}]
  %s5 = inlined_call_operand.vmem [shape: f32[1,512], index: 5, kind: input, shape index: {}]
  %s6 = inlined_call_operand.hbm [shape: bf16[512,512], index: 6, kind: input, shape index: {}]
  %s7 = inlined_call_operand.vmem [shape: f32[1,512], index: 7, kind: input, shape index: {}]
  %s8 = inlined_call_operand.vmem [shape: f32[1,512], index: 8, kind: input, shape index: {}]
  %s9 = inlined_call_operand.hbm [shape: bf16[512,512], index: 9, kind: input, shape index: {}]
  %s10 = inlined_call_operand.vmem [shape: f32[1,512], index: 10, kind: input, shape index: {}]
  %s11 = inlined_call_operand.vmem [shape: f32[1,512], index: 11, kind: input, shape index: {}]
  %s12 = inlined_call_operand.vmem [shape: bf16[512,128], index: 12, kind: input, shape index: {}]
  %s13 = inlined_call_operand.vmem [shape: f32[1,128], index: 13, kind: input, shape index: {}]
  %s14 = inlined_call_operand.vmem [shape: f32[16,128], index: 14, kind: output, shape index: {}]
  %s15 = sld [smem:[#allocation0]]
  $region74: #{critic_forward.1} parent=0
    _
  %s17 = ssub.s32 1, %s15
  %s18 = scalar_select 0, %s17, %s15
  $region1: #{critic_forward.1} parent=0
    #allocation2 [shape = 'u8[524288]{0}', space=vmem, size = 0x80000, scoped, tag = 'input window, operand 6, single buffered']
    #allocation3 [shape = 's32[1]{0}', space=sflag, size = 0x4, scoped, tag = 'scoped memory for critic_forward.1']
    #allocation4 [shape = 'u8[524288]{0}', space=vmem, size = 0x80000, scoped, tag = 'input window, operand 9, single buffered']
    #allocation5 [shape = 's32[1]{0}', space=sflag, size = 0x4, scoped, tag = 'scoped memory for critic_forward.1']
    %19 = vsyncpa [#allocation3], 0
    %20 = vsyncpa [#allocation5], 0
    // Predicated region
    $region2: #{critic_forward.1} parent=1 // pred_check
      _
    $region3: #{critic_forward.1} parent=1 // pred_check_branch
      %22 = sbr.rel (0) target = $region5
    $region4: #{critic_forward.1} parent=1 // pred_region
      _
    $region5: #{critic_forward.1} parent=1 // pred_fallthru
      _
    // Predicated region
    $region6: #{critic_forward.1} parent=1 // pred_check
      _
    $region7: #{critic_forward.1} parent=1 // pred_check_branch
      %24 = sbr.rel (0) target = $region9
    $region8: #{critic_forward.1} parent=1 // pred_region
      _
    $region9: #{critic_forward.1} parent=1 // pred_fallthru
      _
    // Predicated region
    $region10: #{critic_forward.1} parent=1 // pred_check
      _
    $region11: #{critic_forward.1} parent=1 // pred_check_branch
      %26 = sbr.rel (0) target = $region13
    $region12: #{critic_forward.1} parent=1 // pred_region
      _
    $region13: #{critic_forward.1} parent=1 // pred_fallthru
      _
    // Predicated region
    $region14: #{critic_forward.1} parent=1 // pred_check
      _
    $region15: #{critic_forward.1} parent=1 // pred_check_branch
      %28 = sbr.rel (0) target = $region17
    $region16: #{critic_forward.1} parent=1 // pred_region
      _
    $region17: #{critic_forward.1} parent=1 // pred_fallthru
      _
    // Predicated region
    $region18: #{critic_forward.1} parent=1 // pred_check
      _
    $region19: #{critic_forward.1} parent=1 // pred_check_branch
      %30 = sbr.rel (0) target = $region21
    $region20: #{critic_forward.1} parent=1 // pred_region
      _
    $region21: #{critic_forward.1} parent=1 // pred_fallthru
      _
    // Predicated region
    $region22: #{critic_forward.1} parent=1 // pred_check
      _
    $region23: #{critic_forward.1} parent=1 // pred_check_branch
      %32 = sbr.rel (0) target = $region25
    $region24: #{critic_forward.1} parent=1 // pred_region
      _
    $region25: #{critic_forward.1} parent=1 // pred_fallthru
      _
    // Predicated region
    $region26: #{critic_forward.1} parent=1 // pred_check
      _
    $region27: #{critic_forward.1} parent=1 // pred_check_branch
      %34 = sbr.rel (0) target = $region29
    $region28: #{critic_forward.1} parent=1 // pred_region
      %36 = vsyncadd [#allocation3], 0
      %s37 = sshll.u32 %s6, 4
      %s38 = int_to_ptr.hbm [resolvable:$true] %s37
      %s39 = sshll.u32 [#allocation2], 4
      %s40 = int_to_ptr.vmem [resolvable:$true] %s39
      %45 = dma.hbm_to_vmem [thread:$0]  %s38, 16384, %s40, [#allocation3], 256, 256, 16
    $region29: #{critic_forward.1} parent=1 // pred_fallthru
      _
    // Predicated region
    $region30: #{critic_forward.1} parent=1 // pred_check
      _
    $region31: #{critic_forward.1} parent=1 // pred_check_branch
      %47 = sbr.rel (0) target = $region33
    $region32: #{critic_forward.1} parent=1 // pred_region
      _
    $region33: #{critic_forward.1} parent=1 // pred_fallthru
      _
    // Predicated region
    $region34: #{critic_forward.1} parent=1 // pred_check
      _
    $region35: #{critic_forward.1} parent=1 // pred_check_branch
      %49 = sbr.rel (0) target = $region37
    $region36: #{critic_forward.1} parent=1 // pred_region
      _
    $region37: #{critic_forward.1} parent=1 // pred_fallthru
      _
    // Predicated region
    $region38: #{critic_forward.1} parent=1 // pred_check
      _
    $region39: #{critic_forward.1} parent=1 // pred_check_branch
      %51 = sbr.rel (0) target = $region41
    $region40: #{critic_forward.1} parent=1 // pred_region
      %53 = vsyncadd [#allocation5], 0
      %s54 = sshll.u32 %s9, 4
      %s55 = int_to_ptr.hbm [resolvable:$true] %s54
      %s56 = sshll.u32 [#allocation4], 4
      %s57 = int_to_ptr.vmem [resolvable:$true] %s56
      %62 = dma.hbm_to_vmem [thread:$0]  %s55, 16384, %s57, [#allocation5], 256, 256, 16
    $region41: #{critic_forward.1} parent=1 // pred_fallthru
      _
    // Predicated region
    $region42: #{critic_forward.1} parent=1 // pred_check
      _
    $region43: #{critic_forward.1} parent=1 // pred_check_branch
      %64 = sbr.rel (0) target = $region45
    $region44: #{critic_forward.1} parent=1 // pred_region
      _
    $region45: #{critic_forward.1} parent=1 // pred_fallthru
      _
    // Predicated region
    $region46: #{critic_forward.1} parent=1 // pred_check
      _
    $region47: #{critic_forward.1} parent=1 // pred_check_branch
      %66 = sbr.rel (0) target = $region49
    $region48: #{critic_forward.1} parent=1 // pred_region
      _
    $region49: #{critic_forward.1} parent=1 // pred_fallthru
      _
    // Predicated region
    $region50: #{critic_forward.1} parent=1 // pred_check
      _
    $region51: #{critic_forward.1} parent=1 // pred_check_branch
      %68 = sbr.rel (0) target = $region53
    $region52: #{critic_forward.1} parent=1 // pred_region
      _
    $region53: #{critic_forward.1} parent=1 // pred_fallthru
      _
    // Predicated region
    $region54: #{critic_forward.1} parent=1 // pred_check
      _
    $region55: #{critic_forward.1} parent=1 // pred_check_branch
      %70 = sbr.rel (0) target = $region57
    $region56: #{critic_forward.1} parent=1 // pred_region
      _
    $region57: #{critic_forward.1} parent=1 // pred_fallthru
      _
    // Predicated region
    $region58: #{critic_forward.1} parent=1 // pred_check
      _
    $region59: #{critic_forward.1} parent=1 // pred_check_branch
      %72 = sbr.rel (0) target = $region61
    $region60: #{critic_forward.1} parent=1 // pred_region
      %74 = dma.done [#allocation3], 16384
    $region61: #{critic_forward.1} parent=1 // pred_fallthru
      _
    // Predicated region
    $region62: #{critic_forward.1} parent=1 // pred_check
      _
    $region63: #{critic_forward.1} parent=1 // pred_check_branch
      %76 = sbr.rel (0) target = $region65
    $region64: #{critic_forward.1} parent=1 // pred_region
      %78 = dma.done [#allocation5], 16384
    $region65: #{critic_forward.1} parent=1 // pred_fallthru
      _
    %v79 = vld [vmem:[%s0] sm:$0xff]
    %v80 = vld [vmem:[%s0 + $0x8] sm:$0xff]
    %v81 = vadd.f32 %v79, %v80
    %v82 = vrot.slane %v81, 4
    %v83 = vadd.f32 %v81, %v82
    %v84 = vrot.slane %v83, 2
    %v85 = vadd.f32 %v83, %v84
    %v86 = vrot.slane %v85, 1
    %v87 = vadd.f32 %v85, %v86
    %v88 = vmul.f32 %v87, 0.0625
    %v89 = vmul.f32 %v79, %v79
    %v90 = vmul.f32 %v80, %v80
    %v91 = vadd.f32 %v89, %v90
    %v92 = vrot.slane %v91, 4
    %v93 = vadd.f32 %v91, %v92
    %v94 = vrot.slane %v93, 2
    %v95 = vadd.f32 %v93, %v94
    %v96 = vrot.slane %v95, 1
    %v97 = vadd.f32 %v95, %v96
    %v98 = vmul.f32 %v97, 0.0625
    %v99 = vmul.f32 %v88, %v88
    %v100 = vsub.f32 %v98, %v99
    %v101 = vlaneseq
    %v102 = vand.u32 %v101, 127
    %vm103 = vcmp.lt.s32.totalorder %v102, 32
    %v104 = vld [vmem:[%s1] sm:$0x1]
    %v105 = vadd.f32 %v100, 1e-05
    %v106 = vrsqrt.pop %v105
    %v107 = vmul.f32 %v106, %v105
    %v108 = vmul.f32 %v107, %v106
    %v109 = vmul.f32 0.5, %v108
    %v110 = vsub.f32 1.5, %v109
    %v111 = vmul.f32 %v106, %v110
    %vm112 = vweird.f32 %v105
    %vm113 = vweird.f32 %v106
    %vm114 = vmor %vm112, %vm113
    %v115 = vsel %vm114, %v106, %v111
    %v116 = vmul.f32 %v104, %v115
    %v117 = vsel %vm103, %v116, 1.0
    %v118 = vld [vmem:[%s2] sm:$0x1]
    %v119 = vmul.f32 %v88, %v117
    %v120 = vsub.f32 %v118, %v119
    %v121 = vsel %vm103, %v120, 0.0
    %v122 = vperm.slane %v117, 0
    %v123 = vmul.f32 %v79, %v122
    %v124 = vmul.f32 %v80, %v122
    %v125 = vperm.slane %v121, 0
    %v126 = vadd.f32 %v123, %v125
    %v127 = vadd.f32 %v124, %v125
    %v128 = vpack.c.bf16 %v127, %v126
    %v129 = vld [vmem:[%s3] sm:$0xff]
    %v130 = vld [vmem:[%s3 + $0x8] sm:$0xff]
    %v131 = vld [vmem:[%s3 + $0x10] sm:$0xff]
    %v132 = vld [vmem:[%s3 + $0x18] sm:$0xff]
    %v133 = vld [vmem:[%s3 + $0x20] sm:$0xff]
    %v134 = vld [vmem:[%s3 + $0x28] sm:$0xff]
    %v135 = vld [vmem:[%s3 + $0x30] sm:$0xff]
    %v136 = vld [vmem:[%s3 + $0x38] sm:$0xff]
    %v137 = vld [vmem:[%s3 + $0x40] sm:$0xff]
    %v138 = vld [vmem:[%s3 + $0x48] sm:$0xff]
    %v139 = vld [vmem:[%s3 + $0x50] sm:$0xff]
    %v140 = vld [vmem:[%s3 + $0x58] sm:$0xff]
    %v141 = vld [vmem:[%s3 + $0x60] sm:$0xff]
    %v142 = vld [vmem:[%s3 + $0x68] sm:$0xff]
    %v143 = vld [vmem:[%s3 + $0x70] sm:$0xff]
    %v144 = vld [vmem:[%s3 + $0x78] sm:$0xff]
    %v145 = vld [vmem:[%s3 + $0x80] sm:$0xff]
    %v146 = vld [vmem:[%s3 + $0x88] sm:$0xff]
    %v147 = vld [vmem:[%s3 + $0x90] sm:$0xff]
    %v148 = vld [vmem:[%s3 + $0x98] sm:$0xff]
    %v149 = vld [vmem:[%s3 + $0xa0] sm:$0xff]
    %v150 = vld [vmem:[%s3 + $0xa8] sm:$0xff]
    %v151 = vld [vmem:[%s3 + $0xb0] sm:$0xff]
    %v152 = vld [vmem:[%s3 + $0xb8] sm:$0xff]
    %v153 = vld [vmem:[%s3 + $0xc0] sm:$0xff]
    %v154 = vld [vmem:[%s3 + $0xc8] sm:$0xff]
    %v155 = vld [vmem:[%s3 + $0xd0] sm:$0xff]
    %v156 = vld [vmem:[%s3 + $0xd8] sm:$0xff]
    %v157 = vld [vmem:[%s3 + $0xe0] sm:$0xff]
    %v158 = vld [vmem:[%s3 + $0xe8] sm:$0xff]
    %v159 = vld [vmem:[%s3 + $0xf0] sm:$0xff]
    %v160 = vld [vmem:[%s3 + $0xf8] sm:$0xff]
    %v193 = vunpack.c.l.b16 %v129
    %v194 = vunpack.c.h.b16 %v129
    %v195 = vunpack.c.l.b16 %v130
    %v196 = vunpack.c.h.b16 %v130
    %v197 = vunpack.c.l.b16 %v131
    %v198 = vunpack.c.h.b16 %v131
    %v199 = vunpack.c.l.b16 %v132
    %v200 = vunpack.c.h.b16 %v132
    %v201 = vunpack.c.l.b16 %v133
    %v202 = vunpack.c.h.b16 %v133
    %v203 = vunpack.c.l.b16 %v134
    %v204 = vunpack.c.h.b16 %v134
    %v205 = vunpack.c.l.b16 %v135
    %v206 = vunpack.c.h.b16 %v135
    %v207 = vunpack.c.l.b16 %v136
    %v208 = vunpack.c.h.b16 %v136
    %v209 = vunpack.c.l.b16 %v137
    %v210 = vunpack.c.h.b16 %v137
    %v211 = vunpack.c.l.b16 %v138
    %v212 = vunpack.c.h.b16 %v138
    %v213 = vunpack.c.l.b16 %v139
    %v214 = vunpack.c.h.b16 %v139
    %v215 = vunpack.c.l.b16 %v140
    %v216 = vunpack.c.h.b16 %v140
    %v217 = vunpack.c.l.b16 %v141
    %v218 = vunpack.c.h.b16 %v141
    %v219 = vunpack.c.l.b16 %v142
    %v220 = vunpack.c.h.b16 %v142
    %v221 = vunpack.c.l.b16 %v143
    %v222 = vunpack.c.h.b16 %v143
    %v223 = vunpack.c.l.b16 %v144
    %v224 = vunpack.c.h.b16 %v144
    %v225 = vunpack.c.l.b16 %v145
    %v226 = vunpack.c.h.b16 %v145
    %v227 = vunpack.c.l.b16 %v146
    %v228 = vunpack.c.h.b16 %v146
    %v229 = vunpack.c.l.b16 %v147
    %v230 = vunpack.c.h.b16 %v147
    %v231 = vunpack.c.l.b16 %v148
    %v232 = vunpack.c.h.b16 %v148
    %v233 = vunpack.c.l.b16 %v149
    %v234 = vunpack.c.h.b16 %v149
    %v235 = vunpack.c.l.b16 %v150
    %v236 = vunpack.c.h.b16 %v150
    %v237 = vunpack.c.l.b16 %v151
    %v238 = vunpack.c.h.b16 %v151
    %v239 = vunpack.c.l.b16 %v152
    %v240 = vunpack.c.h.b16 %v152
    %v241 = vunpack.c.l.b16 %v153
    %v242 = vunpack.c.h.b16 %v153
    %v243 = vunpack.c.l.b16 %v154
    %v244 = vunpack.c.h.b16 %v154
    %v245 = vunpack.c.l.b16 %v155
    %v246 = vunpack.c.h.b16 %v155
    %v247 = vunpack.c.l.b16 %v156
    %v248 = vunpack.c.h.b16 %v156
    %v249 = vunpack.c.l.b16 %v157
    %v250 = vunpack.c.h.b16 %v157
    %v251 = vunpack.c.l.b16 %v158
    %v252 = vunpack.c.h.b16 %v158
    %v253 = vunpack.c.l.b16 %v159
    %v254 = vunpack.c.h.b16 %v159
    %v255 = vunpack.c.l.b16 %v160
    %v256 = vunpack.c.h.b16 %v160
    %v257 = vpack.c.b16 %v197, %v193
    %v258 = vpack.c.b16 %v198, %v194
    %v259 = vpack.c.b16 %v199, %v195
    %v260 = vpack.c.b16 %v200, %v196
    %v261 = vpack.c.b16 %v205, %v201
    %v262 = vpack.c.b16 %v206, %v202
    %v263 = vpack.c.b16 %v207, %v203
    %v264 = vpack.c.b16 %v208, %v204
    %v265 = vpack.c.b16 %v213, %v209
    %v266 = vpack.c.b16 %v214, %v210
    %v267 = vpack.c.b16 %v215, %v211
    %v268 = vpack.c.b16 %v216, %v212
    %v269 = vpack.c.b16 %v221, %v217
    %v270 = vpack.c.b16 %v222, %v218
    %v271 = vpack.c.b16 %v223, %v219
    %v272 = vpack.c.b16 %v224, %v220
    %v273 = vpack.c.b16 %v229, %v225
    %v274 = vpack.c.b16 %v230, %v226
    %v275 = vpack.c.b16 %v231, %v227
    %v276 = vpack.c.b16 %v232, %v228
    %v277 = vpack.c.b16 %v237, %v233
    %v278 = vpack.c.b16 %v238, %v234
    %v279 = vpack.c.b16 %v239, %v235
    %v280 = vpack.c.b16 %v240, %v236
    %v281 = vpack.c.b16 %v245, %v241
    %v282 = vpack.c.b16 %v246, %v242
    %v283 = vpack.c.b16 %v247, %v243
    %v284 = vpack.c.b16 %v248, %v244
    %v285 = vpack.c.b16 %v253, %v249
    %v286 = vpack.c.b16 %v254, %v250
    %v287 = vpack.c.b16 %v255, %v251
    %v288 = vpack.c.b16 %v256, %v252
    %321 = vmatpush.bf16.msra.mxu0 %v285
    %322 = vmatpush.bf16.msra.mxu0 %v281
    %323 = vmatpush.bf16.msra.mxu0 %v277
    %324 = vmatpush.bf16.msra.mxu0 %v273
    %325 = vmatpush.bf16.msra.mxu0 %v269
    %326 = vmatpush.bf16.msra.mxu0 %v265
    %327 = vmatpush.bf16.msra.mxu0 %v261
    %328 = vmatpush.bf16.msra.mxu0 %v257
    %329 = vmatmul.bf16.gmra.mxu0 %v128
    %v330 = vpop.f32.mrf.mxu0
    %v331 = vadd.f32 0.0, %v330
    %v332 = vpop.f32.mrf.mxu0
    %v333 = vadd.f32 0.0, %v332
    %334 = vdwg.mxu0
    %335 = vmatpush.bf16.msra.mxu0 %v286
    %336 = vmatpush.bf16.msra.mxu0 %v282
    %337 = vmatpush.bf16.msra.mxu0 %v278
    %338 = vmatpush.bf16.msra.mxu0 %v274
    %339 = vmatpush.bf16.msra.mxu0 %v270
    %340 = vmatpush.bf16.msra.mxu0 %v266
    %341 = vmatpush.bf16.msra.mxu0 %v262
    %342 = vmatpush.bf16.msra.mxu0 %v258
    %343 = vmatmul.bf16.gmra.mxu0 %v128
    %v344 = vpop.f32.mrf.mxu0
    %v345 = vadd.f32 0.0, %v344
    %v346 = vpop.f32.mrf.mxu0
    %v347 = vadd.f32 0.0, %v346
    %348 = vdwg.mxu0
    %349 = vmatpush.bf16.msra.mxu0 %v287
    %350 = vmatpush.bf16.msra.mxu0 %v283
    %351 = vmatpush.bf16.msra.mxu0 %v279
    %352 = vmatpush.bf16.msra.mxu0 %v275
    %353 = vmatpush.bf16.msra.mxu0 %v271
    %354 = vmatpush.bf16.msra.mxu0 %v267
    %355 = vmatpush.bf16.msra.mxu0 %v263
    %356 = vmatpush.bf16.msra.mxu0 %v259
    %357 = vmatmul.bf16.gmra.mxu0 %v128
    %v358 = vpop.f32.mrf.mxu0
    %v359 = vadd.f32 0.0, %v358
    %v360 = vpop.f32.mrf.mxu0
    %v361 = vadd.f32 0.0, %v360
    %362 = vdwg.mxu0
    %363 = vmatpush.bf16.msra.mxu0 %v288
    %364 = vmatpush.bf16.msra.mxu0 %v284
    %365 = vmatpush.bf16.msra.mxu0 %v280
    %366 = vmatpush.bf16.msra.mxu0 %v276
    %367 = vmatpush.bf16.msra.mxu0 %v272
    %368 = vmatpush.bf16.msra.mxu0 %v268
    %369 = vmatpush.bf16.msra.mxu0 %v264
    %370 = vmatpush.bf16.msra.mxu0 %v260
    %371 = vmatmul.bf16.gmra.mxu0 %v128
    %v372 = vpop.f32.mrf.mxu0
    %v373 = vadd.f32 0.0, %v372
    %v374 = vpop.f32.mrf.mxu0
    %v375 = vadd.f32 0.0, %v374
    %376 = vdwg.mxu0
    %v377 = vadd.f32 %v331, %v333
    %v378 = vrot.slane %v377, 4
    %v379 = vadd.f32 %v377, %v378
    %v380 = vrot.slane %v379, 2
    %v381 = vadd.f32 %v379, %v380
    %v382 = vrot.slane %v381, 1
    %v383 = vadd.f32 %v381, %v382
    %v384 = vadd.f32 %v345, %v347
    %v385 = vrot.slane %v384, 4
    %v386 = vadd.f32 %v384, %v385
    %v387 = vrot.slane %v386, 2
    %v388 = vadd.f32 %v386, %v387
    %v389 = vrot.slane %v388, 1
    %v390 = vadd.f32 %v388, %v389
    %v391 = vadd.f32 %v359, %v361
    %v392 = vrot.slane %v391, 4
    %v393 = vadd.f32 %v391, %v392
    %v394 = vrot.slane %v393, 2
    %v395 = vadd.f32 %v393, %v394
    %v396 = vrot.slane %v395, 1
    %v397 = vadd.f32 %v395, %v396
    %v398 = vadd.f32 %v373, %v375
    %v399 = vrot.slane %v398, 4
    %v400 = vadd.f32 %v398, %v399
    %v401 = vrot.slane %v400, 2
    %v402 = vadd.f32 %v400, %v401
    %v403 = vrot.slane %v402, 1
    %v404 = vadd.f32 %v402, %v403
    %v405 = vmul.f32 %v383, 0.0625
    %v406 = vmul.f32 %v390, 0.0625
    %v407 = vmul.f32 %v397, 0.0625
    %v408 = vmul.f32 %v404, 0.0625
    %v409 = vmul.f32 %v331, %v331
    %v410 = vmul.f32 %v345, %v345
    %v411 = vmul.f32 %v359, %v359
    %v412 = vmul.f32 %v373, %v373
    %v413 = vmul.f32 %v333, %v333
    %v414 = vmul.f32 %v347, %v347
    %v415 = vmul.f32 %v361, %v361
    %v416 = vmul.f32 %v375, %v375
    %v417 = vadd.f32 %v409, %v413
    %v418 = vrot.slane %v417, 4
    %v419 = vadd.f32 %v417, %v418
    %v420 = vrot.slane %v419, 2
    %v421 = vadd.f32 %v419, %v420
    %v422 = vrot.slane %v421, 1
    %v423 = vadd.f32 %v421, %v422
    %v424 = vadd.f32 %v410, %v414
    %v425 = vrot.slane %v424, 4
    %v426 = vadd.f32 %v424, %v425
    %v427 = vrot.slane %v426, 2
    %v428 = vadd.f32 %v426, %v427
    %v429 = vrot.slane %v428, 1
    %v430 = vadd.f32 %v428, %v429
    %v431 = vadd.f32 %v411, %v415
    %v432 = vrot.slane %v431, 4
    %v433 = vadd.f32 %v431, %v432
    %v434 = vrot.slane %v433, 2
    %v435 = vadd.f32 %v433, %v434
    %v436 = vrot.slane %v435, 1
    %v437 = vadd.f32 %v435, %v436
    %v438 = vadd.f32 %v412, %v416
    %v439 = vrot.slane %v438, 4
    %v440 = vadd.f32 %v438, %v439
    %v441 = vrot.slane %v440, 2
    %v442 = vadd.f32 %v440, %v441
    %v443 = vrot.slane %v442, 1
    %v444 = vadd.f32 %v442, %v443
    %v445 = vmul.f32 %v423, 0.0625
    %v446 = vmul.f32 %v430, 0.0625
    %v447 = vmul.f32 %v437, 0.0625
    %v448 = vmul.f32 %v444, 0.0625
    %v449 = vld [vmem:[%s4] sm:$0xf]
    %v450 = vmul.f32 %v405, %v405
    %v451 = vmul.f32 %v406, %v406
    %v452 = vmul.f32 %v407, %v407
    %v453 = vmul.f32 %v408, %v408
    %v454 = vsub.f32 %v445, %v450
    %v455 = vsub.f32 %v446, %v451
    %v456 = vsub.f32 %v447, %v452
    %v457 = vsub.f32 %v448, %v453
    %v458 = vadd.f32 %v454, 1e-05
    %v459 = vadd.f32 %v455, 1e-05
    %v460 = vadd.f32 %v456, 1e-05
    %v461 = vadd.f32 %v457, 1e-05
    %v462 = vrsqrt.pop %v458
    %v463 = vmul.f32 %v462, %v458
    %v464 = vmul.f32 %v463, %v462
    %v465 = vmul.f32 0.5, %v464
    %v466 = vsub.f32 1.5, %v465
    %v467 = vmul.f32 %v462, %v466
    %vm468 = vweird.f32 %v458
    %vm469 = vweird.f32 %v462
    %vm470 = vmor %vm468, %vm469
    %v471 = vsel %vm470, %v462, %v467
    %v472 = vrsqrt.pop %v459
    %v473 = vmul.f32 %v472, %v459
    %v474 = vmul.f32 %v473, %v472
    %v475 = vmul.f32 0.5, %v474
    %v476 = vsub.f32 1.5, %v475
    %v477 = vmul.f32 %v472, %v476
    %vm478 = vweird.f32 %v459
    %vm479 = vweird.f32 %v472
    %vm480 = vmor %vm478, %vm479
    %v481 = vsel %vm480, %v472, %v477
    %v482 = vrsqrt.pop %v460
    %v483 = vmul.f32 %v482, %v460
    %v484 = vmul.f32 %v483, %v482
    %v485 = vmul.f32 0.5, %v484
    %v486 = vsub.f32 1.5, %v485
    %v487 = vmul.f32 %v482, %v486
    %vm488 = vweird.f32 %v460
    %vm489 = vweird.f32 %v482
    %vm490 = vmor %vm488, %vm489
    %v491 = vsel %vm490, %v482, %v487
    %v492 = vrsqrt.pop %v461
    %v493 = vmul.f32 %v492, %v461
    %v494 = vmul.f32 %v493, %v492
    %v495 = vmul.f32 0.5, %v494
    %v496 = vsub.f32 1.5, %v495
    %v497 = vmul.f32 %v492, %v496
    %vm498 = vweird.f32 %v461
    %vm499 = vweird.f32 %v492
    %vm500 = vmor %vm498, %vm499
    %v501 = vsel %vm500, %v492, %v497
    %v506 = vrot.slane %v481, 7
    %v507 = vrot.slane %v491, 6
    %v508 = vrot.slane %v501, 5
    %vm509 = vcmask 1040384
    %v510 = vsel %vm509, %v471, %v506
    %vm511 = vcmask 1042434
    %v512 = vsel %vm511, %v507, %v508
    %vm513 = vcmask 1041408
    %v514 = vsel %vm513, %v510, %v512
    %v516 = vmul.f32 %v449, %v514
    %v517 = vld [vmem:[%s5] sm:$0xf]
    %v519 = vperm.slane %v516, 0
    %v520 = vperm.slane %v516, 1
    %v521 = vperm.slane %v516, 2
    %v522 = vperm.slane %v516, 3
    %v527 = vmul.f32 %v405, %v519
    %v528 = vmul.f32 %v406, %v520
    %v529 = vmul.f32 %v407, %v521
    %v530 = vmul.f32 %v408, %v522
    %v535 = vrot.slane %v528, 7
    %v536 = vrot.slane %v529, 6
    %v537 = vrot.slane %v530, 5
    %v538 = vsel %vm509, %v527, %v535
    %v539 = vsel %vm511, %v536, %v537
    %v540 = vsel %vm513, %v538, %v539
    %v542 = vsub.f32 %v517, %v540
    %v543 = vmul.f32 %v331, %v519
    %v544 = vmul.f32 %v345, %v520
    %v545 = vmul.f32 %v359, %v521
    %v546 = vmul.f32 %v373, %v522
    %v547 = vmul.f32 %v333, %v519
    %v548 = vmul.f32 %v347, %v520
    %v549 = vmul.f32 %v361, %v521
    %v550 = vmul.f32 %v375, %v522
    %v552 = vperm.slane %v542, 0
    %v553 = vperm.slane %v542, 1
    %v554 = vperm.slane %v542, 2
    %v555 = vperm.slane %v542, 3
    %v560 = vadd.f32 %v543, %v552
    %v561 = vadd.f32 %v544, %v553
    %v562 = vadd.f32 %v545, %v554
    %v563 = vadd.f32 %v546, %v555
    %v564 = vadd.f32 %v547, %v552
    %v565 = vadd.f32 %v548, %v553
    %v566 = vadd.f32 %v549, %v554
    %v567 = vadd.f32 %v550, %v555
    %v568 = vmax.f32 %v560, 0.0
    %v569 = vmax.f32 %v561, 0.0
    %v570 = vmax.f32 %v562, 0.0
    %v571 = vmax.f32 %v563, 0.0
    %v572 = vmax.f32 %v564, 0.0
    %v573 = vmax.f32 %v565, 0.0
    %v574 = vmax.f32 %v566, 0.0
    %v575 = vmax.f32 %v567, 0.0
    %v576 = vpack.c.bf16 %v572, %v568
    %v577 = vpack.c.bf16 %v573, %v569
    %v578 = vpack.c.bf16 %v574, %v570
    %v579 = vpack.c.bf16 %v575, %v571
    %v580 = vld [vmem:[#allocation2] sm:$0xff]
    %v581 = vld [vmem:[#allocation2 + $0x8] sm:$0xff]
    %v582 = vld [vmem:[#allocation2 + $0x10] sm:$0xff]
    %v583 = vld [vmem:[#allocation2 + $0x18] sm:$0xff]
    %v584 = vld [vmem:[#allocation2 + $0x20] sm:$0xff]
    %v585 = vld [vmem:[#allocation2 + $0x28] sm:$0xff]
    %v586 = vld [vmem:[#allocation2 + $0x30] sm:$0xff]
    %v587 = vld [vmem:[#allocation2 + $0x38] sm:$0xff]
    %v588 = vld [vmem:[#allocation2 + $0x40] sm:$0xff]
    %v589 = vld [vmem:[#allocation2 + $0x48] sm:$0xff]
    %v590 = vld [vmem:[#allocation2 + $0x50] sm:$0xff]
    %v591 = vld [vmem:[#allocation2 + $0x58] sm:$0xff]
    %v592 = vld [vmem:[#allocation2 + $0x60] sm:$0xff]
    %v593 = vld [vmem:[#allocation2 + $0x68] sm:$0xff]
    %v594 = vld [vmem:[#allocation2 + $0x70] sm:$0xff]
    %v595 = vld [vmem:[#allocation2 + $0x78] sm:$0xff]
    %v596 = vld [vmem:[#allocation2 + $0x80] sm:$0xff]
    %v597 = vld [vmem:[#allocation2 + $0x88] sm:$0xff]
    %v598 = vld [vmem:[#allocation2 + $0x90] sm:$0xff]
    %v599 = vld [vmem:[#allocation2 + $0x98] sm:$0xff]
    %v600 = vld [vmem:[#allocation2 + $0xa0] sm:$0xff]
    %v601 = vld [vmem:[#allocation2 + $0xa8] sm:$0xff]
    %v602 = vld [vmem:[#allocation2 + $0xb0] sm:$0xff]
    %v603 = vld [vmem:[#allocation2 + $0xb8] sm:$0xff]
    %v604 = vld [vmem:[#allocation2 + $0xc0] sm:$0xff]
    %v605 = vld [vmem:[#allocation2 + $0xc8] sm:$0xff]
    %v606 = vld [vmem:[#allocation2 + $0xd0] sm:$0xff]
    %v607 = vld [vmem:[#allocation2 + $0xd8] sm:$0xff]
    %v608 = vld [vmem:[#allocation2 + $0xe0] sm:$0xff]
    %v609 = vld [vmem:[#allocation2 + $0xe8] sm:$0xff]
    %v610 = vld [vmem:[#allocation2 + $0xf0] sm:$0xff]
    %v611 = vld [vmem:[#allocation2 + $0xf8] sm:$0xff]
    %v612 = vld [vmem:[#allocation2 + $0x100] sm:$0xff]
    %v613 = vld [vmem:[#allocation2 + $0x108] sm:$0xff]
    %v614 = vld [vmem:[#allocation2 + $0x110] sm:$0xff]
    %v615 = vld [vmem:[#allocation2 + $0x118] sm:$0xff]
    %v616 = vld [vmem:[#allocation2 + $0x120] sm:$0xff]
    %v617 = vld [vmem:[#allocation2 + $0x128] sm:$0xff]
    %v618 = vld [vmem:[#allocation2 + $0x130] sm:$0xff]
    %v619 = vld [vmem:[#allocation2 + $0x138] sm:$0xff]
    %v620 = vld [vmem:[#allocation2 + $0x140] sm:$0xff]
    %v621 = vld [vmem:[#allocation2 + $0x148] sm:$0xff]
    %v622 = vld [vmem:[#allocation2 + $0x150] sm:$0xff]
    %v623 = vld [vmem:[#allocation2 + $0x158] sm:$0xff]
    %v624 = vld [vmem:[#allocation2 + $0x160] sm:$0xff]
    %v625 = vld [vmem:[#allocation2 + $0x168] sm:$0xff]
    %v626 = vld [vmem:[#allocation2 + $0x170] sm:$0xff]
    %v627 = vld [vmem:[#allocation2 + $0x178] sm:$0xff]
    %v628 = vld [vmem:[#allocation2 + $0x180] sm:$0xff]
    %v629 = vld [vmem:[#allocation2 + $0x188] sm:$0xff]
    %v630 = vld [vmem:[#allocation2 + $0x190] sm:$0xff]
    %v631 = vld [vmem:[#allocation2 + $0x198] sm:$0xff]
    %v632 = vld [vmem:[#allocation2 + $0x1a0] sm:$0xff]
    %v633 = vld [vmem:[#allocation2 + $0x1a8] sm:$0xff]
    %v634 = vld [vmem:[#allocation2 + $0x1b0] sm:$0xff]
    %v635 = vld [vmem:[#allocation2 + $0x1b8] sm:$0xff]
    %v636 = vld [vmem:[#allocation2 + $0x1c0] sm:$0xff]
    %v637 = vld [vmem:[#allocation2 + $0x1c8] sm:$0xff]
    %v638 = vld [vmem:[#allocation2 + $0x1d0] sm:$0xff]
    %v639 = vld [vmem:[#allocation2 + $0x1d8] sm:$0xff]
    %v640 = vld [vmem:[#allocation2 + $0x1e0] sm:$0xff]
    %v641 = vld [vmem:[#allocation2 + $0x1e8] sm:$0xff]
    %v642 = vld [vmem:[#allocation2 + $0x1f0] sm:$0xff]
    %v643 = vld [vmem:[#allocation2 + $0x1f8] sm:$0xff]
    %v644 = vld [vmem:[#allocation2 + $0x200] sm:$0xff]
    %v645 = vld [vmem:[#allocation2 + $0x208] sm:$0xff]
    %v646 = vld [vmem:[#allocation2 + $0x210] sm:$0xff]
    %v647 = vld [vmem:[#allocation2 + $0x218] sm:$0xff]
    %v648 = vld [vmem:[#allocation2 + $0x220] sm:$0xff]
    %v649 = vld [vmem:[#allocation2 + $0x228] sm:$0xff]
    %v650 = vld [vmem:[#allocation2 + $0x230] sm:$0xff]
    %v651 = vld [vmem:[#allocation2 + $0x238] sm:$0xff]
    %v652 = vld [vmem:[#allocation2 + $0x240] sm:$0xff]
    %v653 = vld [vmem:[#allocation2 + $0x248] sm:$0xff]
    %v654 = vld [vmem:[#allocation2 + $0x250] sm:$0xff]
    %v655 = vld [vmem:[#allocation2 + $0x258] sm:$0xff]
    %v656 = vld [vmem:[#allocation2 + $0x260] sm:$0xff]
    %v657 = vld [vmem:[#allocation2 + $0x268] sm:$0xff]
    %v658 = vld [vmem:[#allocation2 + $0x270] sm:$0xff]
    %v659 = vld [vmem:[#allocation2 + $0x278] sm:$0xff]
    %v660 = vld [vmem:[#allocation2 + $0x280] sm:$0xff]
    %v661 = vld [vmem:[#allocation2 + $0x288] sm:$0xff]
    %v662 = vld [vmem:[#allocation2 + $0x290] sm:$0xff]
    %v663 = vld [vmem:[#allocation2 + $0x298] sm:$0xff]
    %v664 = vld [vmem:[#allocation2 + $0x2a0] sm:$0xff]
    %v665 = vld [vmem:[#allocation2 + $0x2a8] sm:$0xff]
    %v666 = vld [vmem:[#allocation2 + $0x2b0] sm:$0xff]
    %v667 = vld [vmem:[#allocation2 + $0x2b8] sm:$0xff]
    %v668 = vld [vmem:[#allocation2 + $0x2c0] sm:$0xff]
    %v669 = vld [vmem:[#allocation2 + $0x2c8] sm:$0xff]
    %v670 = vld [vmem:[#allocation2 + $0x2d0] sm:$0xff]
    %v671 = vld [vmem:[#allocation2 + $0x2d8] sm:$0xff]
    %v672 = vld [vmem:[#allocation2 + $0x2e0] sm:$0xff]
    %v673 = vld [vmem:[#allocation2 + $0x2e8] sm:$0xff]
    %v674 = vld [vmem:[#allocation2 + $0x2f0] sm:$0xff]
    %v675 = vld [vmem:[#allocation2 + $0x2f8] sm:$0xff]
    %v676 = vld [vmem:[#allocation2 + $0x300] sm:$0xff]
    %v677 = vld [vmem:[#allocation2 + $0x308] sm:$0xff]
    %v678 = vld [vmem:[#allocation2 + $0x310] sm:$0xff]
    %v679 = vld [vmem:[#allocation2 + $0x318] sm:$0xff]
    %v680 = vld [vmem:[#allocation2 + $0x320] sm:$0xff]
    %v681 = vld [vmem:[#allocation2 + $0x328] sm:$0xff]
    %v682 = vld [vmem:[#allocation2 + $0x330] sm:$0xff]
    %v683 = vld [vmem:[#allocation2 + $0x338] sm:$0xff]
    %v684 = vld [vmem:[#allocation2 + $0x340] sm:$0xff]
    %v685 = vld [vmem:[#allocation2 + $0x348] sm:$0xff]
    %v686 = vld [vmem:[#allocation2 + $0x350] sm:$0xff]
    %v687 = vld [vmem:[#allocation2 + $0x358] sm:$0xff]
    %v688 = vld [vmem:[#allocation2 + $0x360] sm:$0xff]
    %v689 = vld [vmem:[#allocation2 + $0x368] sm:$0xff]
    %v690 = vld [vmem:[#allocation2 + $0x370] sm:$0xff]
    %v691 = vld [vmem:[#allocation2 + $0x378] sm:$0xff]
    %v692 = vld [vmem:[#allocation2 + $0x380] sm:$0xff]
    %v693 = vld [vmem:[#allocation2 + $0x388] sm:$0xff]
    %v694 = vld [vmem:[#allocation2 + $0x390] sm:$0xff]
    %v695 = vld [vmem:[#allocation2 + $0x398] sm:$0xff]
    %v696 = vld [vmem:[#allocation2 + $0x3a0] sm:$0xff]
    %v697 = vld [vmem:[#allocation2 + $0x3a8] sm:$0xff]
    %v698 = vld [vmem:[#allocation2 + $0x3b0] sm:$0xff]
    %v699 = vld [vmem:[#allocation2 + $0x3b8] sm:$0xff]
    %v700 = vld [vmem:[#allocation2 + $0x3c0] sm:$0xff]
    %v701 = vld [vmem:[#allocation2 + $0x3c8] sm:$0xff]
    %v702 = vld [vmem:[#allocation2 + $0x3d0] sm:$0xff]
    %v703 = vld [vmem:[#allocation2 + $0x3d8] sm:$0xff]
    %v704 = vld [vmem:[#allocation2 + $0x3e0] sm:$0xff]
    %v705 = vld [vmem:[#allocation2 + $0x3e8] sm:$0xff]
    %v706 = vld [vmem:[#allocation2 + $0x3f0] sm:$0xff]
    %v707 = vld [vmem:[#allocation2 + $0x3f8] sm:$0xff]
    %v836 = vunpack.c.l.b16 %v580
    %v837 = vunpack.c.h.b16 %v580
    %v838 = vunpack.c.l.b16 %v581
    %v839 = vunpack.c.h.b16 %v581
    %v840 = vunpack.c.l.b16 %v582
    %v841 = vunpack.c.h.b16 %v582
    %v842 = vunpack.c.l.b16 %v583
    %v843 = vunpack.c.h.b16 %v583
    %v844 = vunpack.c.l.b16 %v584
    %v845 = vunpack.c.h.b16 %v584
    %v846 = vunpack.c.l.b16 %v585
    %v847 = vunpack.c.h.b16 %v585
    %v848 = vunpack.c.l.b16 %v586
    %v849 = vunpack.c.h.b16 %v586
    %v850 = vunpack.c.l.b16 %v587
    %v851 = vunpack.c.h.b16 %v587
    %v852 = vunpack.c.l.b16 %v588
    %v853 = vunpack.c.h.b16 %v588
    %v854 = vunpack.c.l.b16 %v589
    %v855 = vunpack.c.h.b16 %v589
    %v856 = vunpack.c.l.b16 %v590
    %v857 = vunpack.c.h.b16 %v590
    %v858 = vunpack.c.l.b16 %v591
    %v859 = vunpack.c.h.b16 %v591
    %v860 = vunpack.c.l.b16 %v592
    %v861 = vunpack.c.h.b16 %v592
    %v862 = vunpack.c.l.b16 %v593
    %v863 = vunpack.c.h.b16 %v593
    %v864 = vunpack.c.l.b16 %v594
    %v865 = vunpack.c.h.b16 %v594
    %v866 = vunpack.c.l.b16 %v595
    %v867 = vunpack.c.h.b16 %v595
    %v868 = vunpack.c.l.b16 %v596
    %v869 = vunpack.c.h.b16 %v596
    %v870 = vunpack.c.l.b16 %v597
    %v871 = vunpack.c.h.b16 %v597
    %v872 = vunpack.c.l.b16 %v598
    %v873 = vunpack.c.h.b16 %v598
    %v874 = vunpack.c.l.b16 %v599
    %v875 = vunpack.c.h.b16 %v599
    %v876 = vunpack.c.l.b16 %v600
    %v877 = vunpack.c.h.b16 %v600
    %v878 = vunpack.c.l.b16 %v601
    %v879 = vunpack.c.h.b16 %v601
    %v880 = vunpack.c.l.b16 %v602
    %v881 = vunpack.c.h.b16 %v602
    %v882 = vunpack.c.l.b16 %v603
    %v883 = vunpack.c.h.b16 %v603
    %v884 = vunpack.c.l.b16 %v604
    %v885 = vunpack.c.h.b16 %v604
    %v886 = vunpack.c.l.b16 %v605
    %v887 = vunpack.c.h.b16 %v605
    %v888 = vunpack.c.l.b16 %v606
    %v889 = vunpack.c.h.b16 %v606
    %v890 = vunpack.c.l.b16 %v607
    %v891 = vunpack.c.h.b16 %v607
    %v892 = vunpack.c.l.b16 %v608
    %v893 = vunpack.c.h.b16 %v608
    %v894 = vunpack.c.l.b16 %v609
    %v895 = vunpack.c.h.b16 %v609
    %v896 = vunpack.c.l.b16 %v610
    %v897 = vunpack.c.h.b16 %v610
    %v898 = vunpack.c.l.b16 %v611
    %v899 = vunpack.c.h.b16 %v611
    %v900 = vunpack.c.l.b16 %v612
    %v901 = vunpack.c.h.b16 %v612
    %v902 = vunpack.c.l.b16 %v613
    %v903 = vunpack.c.h.b16 %v613
    %v904 = vunpack.c.l.b16 %v614
    %v905 = vunpack.c.h.b16 %v614
    %v906 = vunpack.c.l.b16 %v615
    %v907 = vunpack.c.h.b16 %v615
    %v908 = vunpack.c.l.b16 %v616
    %v909 = vunpack.c.h.b16 %v616
    %v910 = vunpack.c.l.b16 %v617
    %v911 = vunpack.c.h.b16 %v617
    %v912 = vunpack.c.l.b16 %v618
    %v913 = vunpack.c.h.b16 %v618
    %v914 = vunpack.c.l.b16 %v619
    %v915 = vunpack.c.h.b16 %v619
    %v916 = vunpack.c.l.b16 %v620
    %v917 = vunpack.c.h.b16 %v620
    %v918 = vunpack.c.l.b16 %v621
    %v919 = vunpack.c.h.b16 %v621
    %v920 = vunpack.c.l.b16 %v622
    %v921 = vunpack.c.h.b16 %v622
    %v922 = vunpack.c.l.b16 %v623
    %v923 = vunpack.c.h.b16 %v623
    %v924 = vunpack.c.l.b16 %v624
    %v925 = vunpack.c.h.b16 %v624
    %v926 = vunpack.c.l.b16 %v625
    %v927 = vunpack.c.h.b16 %v625
    %v928 = vunpack.c.l.b16 %v626
    %v929 = vunpack.c.h.b16 %v626
    %v930 = vunpack.c.l.b16 %v627
    %v931 = vunpack.c.h.b16 %v627
    %v932 = vunpack.c.l.b16 %v628
    %v933 = vunpack.c.h.b16 %v628
    %v934 = vunpack.c.l.b16 %v629
    %v935 = vunpack.c.h.b16 %v629
    %v936 = vunpack.c.l.b16 %v630
    %v937 = vunpack.c.h.b16 %v630
    %v938 = vunpack.c.l.b16 %v631
    %v939 = vunpack.c.h.b16 %v631
    %v940 = vunpack.c.l.b16 %v632
    %v941 = vunpack.c.h.b16 %v632
    %v942 = vunpack.c.l.b16 %v633
    %v943 = vunpack.c.h.b16 %v633
    %v944 = vunpack.c.l.b16 %v634
    %v945 = vunpack.c.h.b16 %v634
    %v946 = vunpack.c.l.b16 %v635
    %v947 = vunpack.c.h.b16 %v635
    %v948 = vunpack.c.l.b16 %v636
    %v949 = vunpack.c.h.b16 %v636
    %v950 = vunpack.c.l.b16 %v637
    %v951 = vunpack.c.h.b16 %v637
    %v952 = vunpack.c.l.b16 %v638
    %v953 = vunpack.c.h.b16 %v638
    %v954 = vunpack.c.l.b16 %v639
    %v955 = vunpack.c.h.b16 %v639
    %v956 = vunpack.c.l.b16 %v640
    %v957 = vunpack.c.h.b16 %v640
    %v958 = vunpack.c.l.b16 %v641
    %v959 = vunpack.c.h.b16 %v641
    %v960 = vunpack.c.l.b16 %v642
    %v961 = vunpack.c.h.b16 %v642
    %v962 = vunpack.c.l.b16 %v643
    %v963 = vunpack.c.h.b16 %v643
    %v964 = vunpack.c.l.b16 %v644
    %v965 = vunpack.c.h.b16 %v644
    %v966 = vunpack.c.l.b16 %v645
    %v967 = vunpack.c.h.b16 %v645
    %v968 = vunpack.c.l.b16 %v646
    %v969 = vunpack.c.h.b16 %v646
    %v970 = vunpack.c.l.b16 %v647
    %v971 = vunpack.c.h.b16 %v647
    %v972 = vunpack.c.l.b16 %v648
    %v973 = vunpack.c.h.b16 %v648
    %v974 = vunpack.c.l.b16 %v649
    %v975 = vunpack.c.h.b16 %v649
    %v976 = vunpack.c.l.b16 %v650
    %v977 = vunpack.c.h.b16 %v650
    %v978 = vunpack.c.l.b16 %v651
    %v979 = vunpack.c.h.b16 %v651
    %v980 = vunpack.c.l.b16 %v652
    %v981 = vunpack.c.h.b16 %v652
    %v982 = vunpack.c.l.b16 %v653
    %v983 = vunpack.c.h.b16 %v653
    %v984 = vunpack.c.l.b16 %v654
    %v985 = vunpack.c.h.b16 %v654
    %v986 = vunpack.c.l.b16 %v655
    %v987 = vunpack.c.h.b16 %v655
    %v988 = vunpack.c.l.b16 %v656
    %v989 = vunpack.c.h.b16 %v656
    %v990 = vunpack.c.l.b16 %v657
    %v991 = vunpack.c.h.b16 %v657
    %v992 = vunpack.c.l.b16 %v658
    %v993 = vunpack.c.h.b16 %v658
    %v994 = vunpack.c.l.b16 %v659
    %v995 = vunpack.c.h.b16 %v659
    %v996 = vunpack.c.l.b16 %v660
    %v997 = vunpack.c.h.b16 %v660
    %v998 = vunpack.c.l.b16 %v661
    %v999 = vunpack.c.h.b16 %v661
    %v1000 = vunpack.c.l.b16 %v662
    %v1001 = vunpack.c.h.b16 %v662
    %v1002 = vunpack.c.l.b16 %v663
    %v1003 = vunpack.c.h.b16 %v663
    %v1004 = vunpack.c.l.b16 %v664
    %v1005 = vunpack.c.h.b16 %v664
    %v1006 = vunpack.c.l.b16 %v665
    %v1007 = vunpack.c.h.b16 %v665
    %v1008 = vunpack.c.l.b16 %v666
    %v1009 = vunpack.c.h.b16 %v666
    %v1010 = vunpack.c.l.b16 %v667
    %v1011 = vunpack.c.h.b16 %v667
    %v1012 = vunpack.c.l.b16 %v668
    %v1013 = vunpack.c.h.b16 %v668
    %v1014 = vunpack.c.l.b16 %v669
    %v1015 = vunpack.c.h.b16 %v669
    %v1016 = vunpack.c.l.b16 %v670
    %v1017 = vunpack.c.h.b16 %v670
    %v1018 = vunpack.c.l.b16 %v671
    %v1019 = vunpack.c.h.b16 %v671
    %v1020 = vunpack.c.l.b16 %v672
    %v1021 = vunpack.c.h.b16 %v672
    %v1022 = vunpack.c.l.b16 %v673
    %v1023 = vunpack.c.h.b16 %v673
    %v1024 = vunpack.c.l.b16 %v674
    %v1025 = vunpack.c.h.b16 %v674
    %v1026 = vunpack.c.l.b16 %v675
    %v1027 = vunpack.c.h.b16 %v675
    %v1028 = vunpack.c.l.b16 %v676
    %v1029 = vunpack.c.h.b16 %v676
    %v1030 = vunpack.c.l.b16 %v677
    %v1031 = vunpack.c.h.b16 %v677
    %v1032 = vunpack.c.l.b16 %v678
    %v1033 = vunpack.c.h.b16 %v678
    %v1034 = vunpack.c.l.b16 %v679
    %v1035 = vunpack.c.h.b16 %v679
    %v1036 = vunpack.c.l.b16 %v680
    %v1037 = vunpack.c.h.b16 %v680
    %v1038 = vunpack.c.l.b16 %v681
    %v1039 = vunpack.c.h.b16 %v681
    %v1040 = vunpack.c.l.b16 %v682
    %v1041 = vunpack.c.h.b16 %v682
    %v1042 = vunpack.c.l.b16 %v683
    %v1043 = vunpack.c.h.b16 %v683
    %v1044 = vunpack.c.l.b16 %v684
    %v1045 = vunpack.c.h.b16 %v684
    %v1046 = vunpack.c.l.b16 %v685
    %v1047 = vunpack.c.h.b16 %v685
    %v1048 = vunpack.c.l.b16 %v686
    %v1049 = vunpack.c.h.b16 %v686
    %v1050 = vunpack.c.l.b16 %v687
    %v1051 = vunpack.c.h.b16 %v687
    %v1052 = vunpack.c.l.b16 %v688
    %v1053 = vunpack.c.h.b16 %v688
    %v1054 = vunpack.c.l.b16 %v689
    %v1055 = vunpack.c.h.b16 %v689
    %v1056 = vunpack.c.l.b16 %v690
    %v1057 = vunpack.c.h.b16 %v690
    %v1058 = vunpack.c.l.b16 %v691
    %v1059 = vunpack.c.h.b16 %v691
    %v1060 = vunpack.c.l.b16 %v692
    %v1061 = vunpack.c.h.b16 %v692
    %v1062 = vunpack.c.l.b16 %v693
    %v1063 = vunpack.c.h.b16 %v693
    %v1064 = vunpack.c.l.b16 %v694
    %v1065 = vunpack.c.h.b16 %v694
    %v1066 = vunpack.c.l.b16 %v695
    %v1067 = vunpack.c.h.b16 %v695
    %v1068 = vunpack.c.l.b16 %v696
    %v1069 = vunpack.c.h.b16 %v696
    %v1070 = vunpack.c.l.b16 %v697
    %v1071 = vunpack.c.h.b16 %v697
    %v1072 = vunpack.c.l.b16 %v698
    %v1073 = vunpack.c.h.b16 %v698
    %v1074 = vunpack.c.l.b16 %v699
    %v1075 = vunpack.c.h.b16 %v699
    %v1076 = vunpack.c.l.b16 %v700
    %v1077 = vunpack.c.h.b16 %v700
    %v1078 = vunpack.c.l.b16 %v701
    %v1079 = vunpack.c.h.b16 %v701
    %v1080 = vunpack.c.l.b16 %v702
    %v1081 = vunpack.c.h.b16 %v702
    %v1082 = vunpack.c.l.b16 %v703
    %v1083 = vunpack.c.h.b16 %v703
    %v1084 = vunpack.c.l.b16 %v704
    %v1085 = vunpack.c.h.b16 %v704
    %v1086 = vunpack.c.l.b16 %v705
    %v1087 = vunpack.c.h.b16 %v705
    %v1088 = vunpack.c.l.b16 %v706
    %v1089 = vunpack.c.h.b16 %v706
    %v1090 = vunpack.c.l.b16 %v707
    %v1091 = vunpack.c.h.b16 %v707
    %v1092 = vpack.c.b16 %v840, %v836
    %v1093 = vpack.c.b16 %v841, %v837
    %v1094 = vpack.c.b16 %v842, %v838
    %v1095 = vpack.c.b16 %v843, %v839
    %v1096 = vpack.c.b16 %v848, %v844
    %v1097 = vpack.c.b16 %v849, %v845
    %v1098 = vpack.c.b16 %v850, %v846
    %v1099 = vpack.c.b16 %v851, %v847
    %v1100 = vpack.c.b16 %v856, %v852
    %v1101 = vpack.c.b16 %v857, %v853
    %v1102 = vpack.c.b16 %v858, %v854
    %v1103 = vpack.c.b16 %v859, %v855
    %v1104 = vpack.c.b16 %v864, %v860
    %v1105 = vpack.c.b16 %v865, %v861
    %v1106 = vpack.c.b16 %v866, %v862
    %v1107 = vpack.c.b16 %v867, %v863
    %v1108 = vpack.c.b16 %v872, %v868
    %v1109 = vpack.c.b16 %v873, %v869
    %v1110 = vpack.c.b16 %v874, %v870
    %v1111 = vpack.c.b16 %v875, %v871
    %v1112 = vpack.c.b16 %v880, %v876
    %v1113 = vpack.c.b16 %v881, %v877
    %v1114 = vpack.c.b16 %v882, %v878
    %v1115 = vpack.c.b16 %v883, %v879
    %v1116 = vpack.c.b16 %v888, %v884
    %v1117 = vpack.c.b16 %v889, %v885
    %v1118 = vpack.c.b16 %v890, %v886
    %v1119 = vpack.c.b16 %v891, %v887
    %v1120 = vpack.c.b16 %v896, %v892
    %v1121 = vpack.c.b16 %v897, %v893
    %v1122 = vpack.c.b16 %v898, %v894
    %v1123 = vpack.c.b16 %v899, %v895
    %v1124 = vpack.c.b16 %v904, %v900
    %v1125 = vpack.c.b16 %v905, %v901
    %v1126 = vpack.c.b16 %v906, %v902
    %v1127 = vpack.c.b16 %v907, %v903
    %v1128 = vpack.c.b16 %v912, %v908
    %v1129 = vpack.c.b16 %v913, %v909
    %v1130 = vpack.c.b16 %v914, %v910
    %v1131 = vpack.c.b16 %v915, %v911
    %v1132 = vpack.c.b16 %v920, %v916
    %v1133 = vpack.c.b16 %v921, %v917
    %v1134 = vpack.c.b16 %v922, %v918
    %v1135 = vpack.c.b16 %v923, %v919
    %v1136 = vpack.c.b16 %v928, %v924
    %v1137 = vpack.c.b16 %v929, %v925
    %v1138 = vpack.c.b16 %v930, %v926
    %v1139 = vpack.c.b16 %v931, %v927
    %v1140 = vpack.c.b16 %v936, %v932
    %v1141 = vpack.c.b16 %v937, %v933
    %v1142 = vpack.c.b16 %v938, %v934
    %v1143 = vpack.c.b16 %v939, %v935
    %v1144 = vpack.c.b16 %v944, %v940
    %v1145 = vpack.c.b16 %v945, %v941
    %v1146 = vpack.c.b16 %v946, %v942
    %v1147 = vpack.c.b16 %v947, %v943
    %v1148 = vpack.c.b16 %v952, %v948
    %v1149 = vpack.c.b16 %v953, %v949
    %v1150 = vpack.c.b16 %v954, %v950
    %v1151 = vpack.c.b16 %v955, %v951
    %v1152 = vpack.c.b16 %v960, %v956
    %v1153 = vpack.c.b16 %v961, %v957
    %v1154 = vpack.c.b16 %v962, %v958
    %v1155 = vpack.c.b16 %v963, %v959
    %v1156 = vpack.c.b16 %v968, %v964
    %v1157 = vpack.c.b16 %v969, %v965
    %v1158 = vpack.c.b16 %v970, %v966
    %v1159 = vpack.c.b16 %v971, %v967
    %v1160 = vpack.c.b16 %v976, %v972
    %v1161 = vpack.c.b16 %v977, %v973
    %v1162 = vpack.c.b16 %v978, %v974
    %v1163 = vpack.c.b16 %v979, %v975
    %v1164 = vpack.c.b16 %v984, %v980
    %v1165 = vpack.c.b16 %v985, %v981
    %v1166 = vpack.c.b16 %v986, %v982
    %v1167 = vpack.c.b16 %v987, %v983
    %v1168 = vpack.c.b16 %v992, %v988
    %v1169 = vpack.c.b16 %v993, %v989
    %v1170 = vpack.c.b16 %v994, %v990
    %v1171 = vpack.c.b16 %v995, %v991
    %v1172 = vpack.c.b16 %v1000, %v996
    %v1173 = vpack.c.b16 %v1001, %v997
    %v1174 = vpack.c.b16 %v1002, %v998
    %v1175 = vpack.c.b16 %v1003, %v999
    %v1176 = vpack.c.b16 %v1008, %v1004
    %v1177 = vpack.c.b16 %v1009, %v1005
    %v1178 = vpack.c.b16 %v1010, %v1006
    %v1179 = vpack.c.b16 %v1011, %v1007
    %v1180 = vpack.c.b16 %v1016, %v1012
    %v1181 = vpack.c.b16 %v1017, %v1013
    %v1182 = vpack.c.b16 %v1018, %v1014
    %v1183 = vpack.c.b16 %v1019, %v1015
    %v1184 = vpack.c.b16 %v1024, %v1020
    %v1185 = vpack.c.b16 %v1025, %v1021
    %v1186 = vpack.c.b16 %v1026, %v1022
    %v1187 = vpack.c.b16 %v1027, %v1023
    %v1188 = vpack.c.b16 %v1032, %v1028
    %v1189 = vpack.c.b16 %v1033, %v1029
    %v1190 = vpack.c.b16 %v1034, %v1030
    %v1191 = vpack.c.b16 %v1035, %v1031
    %v1192 = vpack.c.b16 %v1040, %v1036
    %v1193 = vpack.c.b16 %v1041, %v1037
    %v1194 = vpack.c.b16 %v1042, %v1038
    %v1195 = vpack.c.b16 %v1043, %v1039
    %v1196 = vpack.c.b16 %v1048, %v1044
    %v1197 = vpack.c.b16 %v1049, %v1045
    %v1198 = vpack.c.b16 %v1050, %v1046
    %v1199 = vpack.c.b16 %v1051, %v1047
    %v1200 = vpack.c.b16 %v1056, %v1052
    %v1201 = vpack.c.b16 %v1057, %v1053
    %v1202 = vpack.c.b16 %v1058, %v1054
    %v1203 = vpack.c.b16 %v1059, %v1055
    %v1204 = vpack.c.b16 %v1064, %v1060
    %v1205 = vpack.c.b16 %v1065, %v1061
    %v1206 = vpack.c.b16 %v1066, %v1062
    %v1207 = vpack.c.b16 %v1067, %v1063
    %v1208 = vpack.c.b16 %v1072, %v1068
    %v1209 = vpack.c.b16 %v1073, %v1069
    %v1210 = vpack.c.b16 %v1074, %v1070
    %v1211 = vpack.c.b16 %v1075, %v1071
    %v1212 = vpack.c.b16 %v1080, %v1076
    %v1213 = vpack.c.b16 %v1081, %v1077
    %v1214 = vpack.c.b16 %v1082, %v1078
    %v1215 = vpack.c.b16 %v1083, %v1079
    %v1216 = vpack.c.b16 %v1088, %v1084
    %v1217 = vpack.c.b16 %v1089, %v1085
    %v1218 = vpack.c.b16 %v1090, %v1086
    %v1219 = vpack.c.b16 %v1091, %v1087
    %1348 = vmatpush.bf16.msra.mxu0 %v1120
    %1349 = vmatpush.bf16.msra.mxu0 %v1116
    %1350 = vmatpush.bf16.msra.mxu0 %v1112
    %1351 = vmatpush.bf16.msra.mxu0 %v1108
    %1352 = vmatpush.bf16.msra.mxu0 %v1104
    %1353 = vmatpush.bf16.msra.mxu0 %v1100
    %1354 = vmatpush.bf16.msra.mxu0 %v1096
    %1355 = vmatpush.bf16.msra.mxu0 %v1092
    %1356 = vmatmul.bf16.gmra.mxu0 %v576
    %v1357 = vpop.f32.mrf.mxu0
    %v1358 = vadd.f32 0.0, %v1357
    %v1359 = vpop.f32.mrf.mxu0
    %v1360 = vadd.f32 0.0, %v1359
    %1361 = vdwg.mxu0
    %1362 = vmatpush.bf16.msra.mxu0 %v1152
    %1363 = vmatpush.bf16.msra.mxu0 %v1148
    %1364 = vmatpush.bf16.msra.mxu0 %v1144
    %1365 = vmatpush.bf16.msra.mxu0 %v1140
    %1366 = vmatpush.bf16.msra.mxu0 %v1136
    %1367 = vmatpush.bf16.msra.mxu0 %v1132
    %1368 = vmatpush.bf16.msra.mxu0 %v1128
    %1369 = vmatpush.bf16.msra.mxu0 %v1124
    %1370 = vmatmul.bf16.gmra.mxu0 %v577
    %v1371 = vpop.f32.mrf.mxu0
    %v1372 = vadd.f32 %v1358, %v1371
    %v1373 = vpop.f32.mrf.mxu0
    %v1374 = vadd.f32 %v1360, %v1373
    %1375 = vdwg.mxu0
    %1376 = vmatpush.bf16.msra.mxu0 %v1184
    %1377 = vmatpush.bf16.msra.mxu0 %v1180
    %1378 = vmatpush.bf16.msra.mxu0 %v1176
    %1379 = vmatpush.bf16.msra.mxu0 %v1172
    %1380 = vmatpush.bf16.msra.mxu0 %v1168
    %1381 = vmatpush.bf16.msra.mxu0 %v1164
    %1382 = vmatpush.bf16.msra.mxu0 %v1160
    %1383 = vmatpush.bf16.msra.mxu0 %v1156
    %1384 = vmatmul.bf16.gmra.mxu0 %v578
    %v1385 = vpop.f32.mrf.mxu0
    %v1386 = vadd.f32 %v1372, %v1385
    %v1387 = vpop.f32.mrf.mxu0
    %v1388 = vadd.f32 %v1374, %v1387
    %1389 = vdwg.mxu0
    %1390 = vmatpush.bf16.msra.mxu0 %v1216
    %1391 = vmatpush.bf16.msra.mxu0 %v1212
    %1392 = vmatpush.bf16.msra.mxu0 %v1208
    %1393 = vmatpush.bf16.msra.mxu0 %v1204
    %1394 = vmatpush.bf16.msra.mxu0 %v1200
    %1395 = vmatpush.bf16.msra.mxu0 %v1196
    %1396 = vmatpush.bf16.msra.mxu0 %v1192
    %1397 = vmatpush.bf16.msra.mxu0 %v1188
    %1398 = vmatmul.bf16.gmra.mxu0 %v579
    %v1399 = vpop.f32.mrf.mxu0
    %v1400 = vadd.f32 %v1386, %v1399
    %v1401 = vpop.f32.mrf.mxu0
    %v1402 = vadd.f32 %v1388, %v1401
    %1403 = vdwg.mxu0
    %1404 = vmatpush.bf16.msra.mxu0 %v1121
    %1405 = vmatpush.bf16.msra.mxu0 %v1117
    %1406 = vmatpush.bf16.msra.mxu0 %v1113
    %1407 = vmatpush.bf16.msra.mxu0 %v1109
    %1408 = vmatpush.bf16.msra.mxu0 %v1105
    %1409 = vmatpush.bf16.msra.mxu0 %v1101
    %1410 = vmatpush.bf16.msra.mxu0 %v1097
    %1411 = vmatpush.bf16.msra.mxu0 %v1093
    %1412 = vmatmul.bf16.gmra.mxu0 %v576
    %v1413 = vpop.f32.mrf.mxu0
    %v1414 = vadd.f32 0.0, %v1413
    %v1415 = vpop.f32.mrf.mxu0
    %v1416 = vadd.f32 0.0, %v1415
    %1417 = vdwg.mxu0
    %1418 = vmatpush.bf16.msra.mxu0 %v1153
    %1419 = vmatpush.bf16.msra.mxu0 %v1149
    %1420 = vmatpush.bf16.msra.mxu0 %v1145
    %1421 = vmatpush.bf16.msra.mxu0 %v1141
    %1422 = vmatpush.bf16.msra.mxu0 %v1137
    %1423 = vmatpush.bf16.msra.mxu0 %v1133
    %1424 = vmatpush.bf16.msra.mxu0 %v1129
    %1425 = vmatpush.bf16.msra.mxu0 %v1125
    %1426 = vmatmul.bf16.gmra.mxu0 %v577
    %v1427 = vpop.f32.mrf.mxu0
    %v1428 = vadd.f32 %v1414, %v1427
    %v1429 = vpop.f32.mrf.mxu0
    %v1430 = vadd.f32 %v1416, %v1429
    %1431 = vdwg.mxu0
    %1432 = vmatpush.bf16.msra.mxu0 %v1185
    %1433 = vmatpush.bf16.msra.mxu0 %v1181
    %1434 = vmatpush.bf16.msra.mxu0 %v1177
    %1435 = vmatpush.bf16.msra.mxu0 %v1173
    %1436 = vmatpush.bf16.msra.mxu0 %v1169
    %1437 = vmatpush.bf16.msra.mxu0 %v1165
    %1438 = vmatpush.bf16.msra.mxu0 %v1161
    %1439 = vmatpush.bf16.msra.mxu0 %v1157
    %1440 = vmatmul.bf16.gmra.mxu0 %v578
    %v1441 = vpop.f32.mrf.mxu0
    %v1442 = vadd.f32 %v1428, %v1441
    %v1443 = vpop.f32.mrf.mxu0
    %v1444 = vadd.f32 %v1430, %v1443
    %1445 = vdwg.mxu0
    %1446 = vmatpush.bf16.msra.mxu0 %v1217
    %1447 = vmatpush.bf16.msra.mxu0 %v1213
    %1448 = vmatpush.bf16.msra.mxu0 %v1209
    %1449 = vmatpush.bf16.msra.mxu0 %v1205
    %1450 = vmatpush.bf16.msra.mxu0 %v1201
    %1451 = vmatpush.bf16.msra.mxu0 %v1197
    %1452 = vmatpush.bf16.msra.mxu0 %v1193
    %1453 = vmatpush.bf16.msra.mxu0 %v1189
    %1454 = vmatmul.bf16.gmra.mxu0 %v579
    %v1455 = vpop.f32.mrf.mxu0
    %v1456 = vadd.f32 %v1442, %v1455
    %v1457 = vpop.f32.mrf.mxu0
    %v1458 = vadd.f32 %v1444, %v1457
    %1459 = vdwg.mxu0
    %1460 = vmatpush.bf16.msra.mxu0 %v1122
    %1461 = vmatpush.bf16.msra.mxu0 %v1118
    %1462 = vmatpush.bf16.msra.mxu0 %v1114
    %1463 = vmatpush.bf16.msra.mxu0 %v1110
    %1464 = vmatpush.bf16.msra.mxu0 %v1106
    %1465 = vmatpush.bf16.msra.mxu0 %v1102
    %1466 = vmatpush.bf16.msra.mxu0 %v1098
    %1467 = vmatpush.bf16.msra.mxu0 %v1094
    %1468 = vmatmul.bf16.gmra.mxu0 %v576
    %v1469 = vpop.f32.mrf.mxu0
    %v1470 = vadd.f32 0.0, %v1469
    %v1471 = vpop.f32.mrf.mxu0
    %v1472 = vadd.f32 0.0, %v1471
    %1473 = vdwg.mxu0
    %1474 = vmatpush.bf16.msra.mxu0 %v1154
    %1475 = vmatpush.bf16.msra.mxu0 %v1150
    %1476 = vmatpush.bf16.msra.mxu0 %v1146
    %1477 = vmatpush.bf16.msra.mxu0 %v1142
    %1478 = vmatpush.bf16.msra.mxu0 %v1138
    %1479 = vmatpush.bf16.msra.mxu0 %v1134
    %1480 = vmatpush.bf16.msra.mxu0 %v1130
    %1481 = vmatpush.bf16.msra.mxu0 %v1126
    %1482 = vmatmul.bf16.gmra.mxu0 %v577
    %v1483 = vpop.f32.mrf.mxu0
    %v1484 = vadd.f32 %v1470, %v1483
    %v1485 = vpop.f32.mrf.mxu0
    %v1486 = vadd.f32 %v1472, %v1485
    %1487 = vdwg.mxu0
    %1488 = vmatpush.bf16.msra.mxu0 %v1186
    %1489 = vmatpush.bf16.msra.mxu0 %v1182
    %1490 = vmatpush.bf16.msra.mxu0 %v1178
    %1491 = vmatpush.bf16.msra.mxu0 %v1174
    %1492 = vmatpush.bf16.msra.mxu0 %v1170
    %1493 = vmatpush.bf16.msra.mxu0 %v1166
    %1494 = vmatpush.bf16.msra.mxu0 %v1162
    %1495 = vmatpush.bf16.msra.mxu0 %v1158
    %1496 = vmatmul.bf16.gmra.mxu0 %v578
    %v1497 = vpop.f32.mrf.mxu0
    %v1498 = vadd.f32 %v1484, %v1497
    %v1499 = vpop.f32.mrf.mxu0
    %v1500 = vadd.f32 %v1486, %v1499
    %1501 = vdwg.mxu0
    %1502 = vmatpush.bf16.msra.mxu0 %v1218
    %1503 = vmatpush.bf16.msra.mxu0 %v1214
    %1504 = vmatpush.bf16.msra.mxu0 %v1210
    %1505 = vmatpush.bf16.msra.mxu0 %v1206
    %1506 = vmatpush.bf16.msra.mxu0 %v1202
    %1507 = vmatpush.bf16.msra.mxu0 %v1198
    %1508 = vmatpush.bf16.msra.mxu0 %v1194
    %1509 = vmatpush.bf16.msra.mxu0 %v1190
    %1510 = vmatmul.bf16.gmra.mxu0 %v579
    %v1511 = vpop.f32.mrf.mxu0
    %v1512 = vadd.f32 %v1498, %v1511
    %v1513 = vpop.f32.mrf.mxu0
    %v1514 = vadd.f32 %v1500, %v1513
    %1515 = vdwg.mxu0
    %1516 = vmatpush.bf16.msra.mxu0 %v1123
    %1517 = vmatpush.bf16.msra.mxu0 %v1119
    %1518 = vmatpush.bf16.msra.mxu0 %v1115
    %1519 = vmatpush.bf16.msra.mxu0 %v1111
    %1520 = vmatpush.bf16.msra.mxu0 %v1107
    %1521 = vmatpush.bf16.msra.mxu0 %v1103
    %1522 = vmatpush.bf16.msra.mxu0 %v1099
    %1523 = vmatpush.bf16.msra.mxu0 %v1095
    %1524 = vmatmul.bf16.gmra.mxu0 %v576
    %v1525 = vpop.f32.mrf.mxu0
    %v1526 = vadd.f32 0.0, %v1525
    %v1527 = vpop.f32.mrf.mxu0
    %v1528 = vadd.f32 0.0, %v1527
    %1529 = vdwg.mxu0
    %1530 = vmatpush.bf16.msra.mxu0 %v1155
    %1531 = vmatpush.bf16.msra.mxu0 %v1151
    %1532 = vmatpush.bf16.msra.mxu0 %v1147
    %1533 = vmatpush.bf16.msra.mxu0 %v1143
    %1534 = vmatpush.bf16.msra.mxu0 %v1139
    %1535 = vmatpush.bf16.msra.mxu0 %v1135
    %1536 = vmatpush.bf16.msra.mxu0 %v1131
    %1537 = vmatpush.bf16.msra.mxu0 %v1127
    %1538 = vmatmul.bf16.gmra.mxu0 %v577
    %v1539 = vpop.f32.mrf.mxu0
    %v1540 = vadd.f32 %v1526, %v1539
    %v1541 = vpop.f32.mrf.mxu0
    %v1542 = vadd.f32 %v1528, %v1541
    %1543 = vdwg.mxu0
    %1544 = vmatpush.bf16.msra.mxu0 %v1187
    %1545 = vmatpush.bf16.msra.mxu0 %v1183
    %1546 = vmatpush.bf16.msra.mxu0 %v1179
    %1547 = vmatpush.bf16.msra.mxu0 %v1175
    %1548 = vmatpush.bf16.msra.mxu0 %v1171
    %1549 = vmatpush.bf16.msra.mxu0 %v1167
    %1550 = vmatpush.bf16.msra.mxu0 %v1163
    %1551 = vmatpush.bf16.msra.mxu0 %v1159
    %1552 = vmatmul.bf16.gmra.mxu0 %v578
    %v1553 = vpop.f32.mrf.mxu0
    %v1554 = vadd.f32 %v1540, %v1553
    %v1555 = vpop.f32.mrf.mxu0
    %v1556 = vadd.f32 %v1542, %v1555
    %1557 = vdwg.mxu0
    %1558 = vmatpush.bf16.msra.mxu0 %v1219
    %1559 = vmatpush.bf16.msra.mxu0 %v1215
    %1560 = vmatpush.bf16.msra.mxu0 %v1211
    %1561 = vmatpush.bf16.msra.mxu0 %v1207
    %1562 = vmatpush.bf16.msra.mxu0 %v1203
    %1563 = vmatpush.bf16.msra.mxu0 %v1199
    %1564 = vmatpush.bf16.msra.mxu0 %v1195
    %1565 = vmatpush.bf16.msra.mxu0 %v1191
    %1566 = vmatmul.bf16.gmra.mxu0 %v579
    %v1567 = vpop.f32.mrf.mxu0
    %v1568 = vadd.f32 %v1554, %v1567
    %v1569 = vpop.f32.mrf.mxu0
    %v1570 = vadd.f32 %v1556, %v1569
    %1571 = vdwg.mxu0
    %v1572 = vadd.f32 %v1400, %v1402
    %v1573 = vrot.slane %v1572, 4
    %v1574 = vadd.f32 %v1572, %v1573
    %v1575 = vrot.slane %v1574, 2
    %v1576 = vadd.f32 %v1574, %v1575
    %v1577 = vrot.slane %v1576, 1
    %v1578 = vadd.f32 %v1576, %v1577
    %v1579 = vadd.f32 %v1456, %v1458
    %v1580 = vrot.slane %v1579, 4
    %v1581 = vadd.f32 %v1579, %v1580
    %v1582 = vrot.slane %v1581, 2
    %v1583 = vadd.f32 %v1581, %v1582
    %v1584 = vrot.slane %v1583, 1
    %v1585 = vadd.f32 %v1583, %v1584
    %v1586 = vadd.f32 %v1512, %v1514
    %v1587 = vrot.slane %v1586, 4
    %v1588 = vadd.f32 %v1586, %v1587
    %v1589 = vrot.slane %v1588, 2
    %v1590 = vadd.f32 %v1588, %v1589
    %v1591 = vrot.slane %v1590, 1
    %v1592 = vadd.f32 %v1590, %v1591
    %v1593 = vadd.f32 %v1568, %v1570
    %v1594 = vrot.slane %v1593, 4
    %v1595 = vadd.f32 %v1593, %v1594
    %v1596 = vrot.slane %v1595, 2
    %v1597 = vadd.f32 %v1595, %v1596
    %v1598 = vrot.slane %v1597, 1
    %v1599 = vadd.f32 %v1597, %v1598
    %v1600 = vmul.f32 %v1578, 0.0625
    %v1601 = vmul.f32 %v1585, 0.0625
    %v1602 = vmul.f32 %v1592, 0.0625
    %v1603 = vmul.f32 %v1599, 0.0625
    %v1604 = vmul.f32 %v1400, %v1400
    %v1605 = vmul.f32 %v1456, %v1456
    %v1606 = vmul.f32 %v1512, %v1512
    %v1607 = vmul.f32 %v1568, %v1568
    %v1608 = vmul.f32 %v1402, %v1402
    %v1609 = vmul.f32 %v1458, %v1458
    %v1610 = vmul.f32 %v1514, %v1514
    %v1611 = vmul.f32 %v1570, %v1570
    %v1612 = vadd.f32 %v1604, %v1608
    %v1613 = vrot.slane %v1612, 4
    %v1614 = vadd.f32 %v1612, %v1613
    %v1615 = vrot.slane %v1614, 2
    %v1616 = vadd.f32 %v1614, %v1615
    %v1617 = vrot.slane %v1616, 1
    %v1618 = vadd.f32 %v1616, %v1617
    %v1619 = vadd.f32 %v1605, %v1609
    %v1620 = vrot.slane %v1619, 4
    %v1621 = vadd.f32 %v1619, %v1620
    %v1622 = vrot.slane %v1621, 2
    %v1623 = vadd.f32 %v1621, %v1622
    %v1624 = vrot.slane %v1623, 1
    %v1625 = vadd.f32 %v1623, %v1624
    %v1626 = vadd.f32 %v1606, %v1610
    %v1627 = vrot.slane %v1626, 4
    %v1628 = vadd.f32 %v1626, %v1627
    %v1629 = vrot.slane %v1628, 2
    %v1630 = vadd.f32 %v1628, %v1629
    %v1631 = vrot.slane %v1630, 1
    %v1632 = vadd.f32 %v1630, %v1631
    %v1633 = vadd.f32 %v1607, %v1611
    %v1634 = vrot.slane %v1633, 4
    %v1635 = vadd.f32 %v1633, %v1634
    %v1636 = vrot.slane %v1635, 2
    %v1637 = vadd.f32 %v1635, %v1636
    %v1638 = vrot.slane %v1637, 1
    %v1639 = vadd.f32 %v1637, %v1638
    %v1640 = vmul.f32 %v1618, 0.0625
    %v1641 = vmul.f32 %v1625, 0.0625
    %v1642 = vmul.f32 %v1632, 0.0625
    %v1643 = vmul.f32 %v1639, 0.0625
    %v1644 = vld [vmem:[%s7] sm:$0xf]
    %v1645 = vmul.f32 %v1600, %v1600
    %v1646 = vmul.f32 %v1601, %v1601
    %v1647 = vmul.f32 %v1602, %v1602
    %v1648 = vmul.f32 %v1603, %v1603
    %v1649 = vsub.f32 %v1640, %v1645
    %v1650 = vsub.f32 %v1641, %v1646
    %v1651 = vsub.f32 %v1642, %v1647
    %v1652 = vsub.f32 %v1643, %v1648
    %v1653 = vadd.f32 %v1649, 1e-05
    %v1654 = vadd.f32 %v1650, 1e-05
    %v1655 = vadd.f32 %v1651, 1e-05
    %v1656 = vadd.f32 %v1652, 1e-05
    %v1657 = vrsqrt.pop %v1653
    %v1658 = vmul.f32 %v1657, %v1653
    %v1659 = vmul.f32 %v1658, %v1657
    %v1660 = vmul.f32 0.5, %v1659
    %v1661 = vsub.f32 1.5, %v1660
    %v1662 = vmul.f32 %v1657, %v1661
    %vm1663 = vweird.f32 %v1653
    %vm1664 = vweird.f32 %v1657
    %vm1665 = vmor %vm1663, %vm1664
    %v1666 = vsel %vm1665, %v1657, %v1662
    %v1667 = vrsqrt.pop %v1654
    %v1668 = vmul.f32 %v1667, %v1654
    %v1669 = vmul.f32 %v1668, %v1667
    %v1670 = vmul.f32 0.5, %v1669
    %v1671 = vsub.f32 1.5, %v1670
    %v1672 = vmul.f32 %v1667, %v1671
    %vm1673 = vweird.f32 %v1654
    %vm1674 = vweird.f32 %v1667
    %vm1675 = vmor %vm1673, %vm1674
    %v1676 = vsel %vm1675, %v1667, %v1672
    %v1677 = vrsqrt.pop %v1655
    %v1678 = vmul.f32 %v1677, %v1655
    %v1679 = vmul.f32 %v1678, %v1677
    %v1680 = vmul.f32 0.5, %v1679
    %v1681 = vsub.f32 1.5, %v1680
    %v1682 = vmul.f32 %v1677, %v1681
    %vm1683 = vweird.f32 %v1655
    %vm1684 = vweird.f32 %v1677
    %vm1685 = vmor %vm1683, %vm1684
    %v1686 = vsel %vm1685, %v1677, %v1682
    %v1687 = vrsqrt.pop %v1656
    %v1688 = vmul.f32 %v1687, %v1656
    %v1689 = vmul.f32 %v1688, %v1687
    %v1690 = vmul.f32 0.5, %v1689
    %v1691 = vsub.f32 1.5, %v1690
    %v1692 = vmul.f32 %v1687, %v1691
    %vm1693 = vweird.f32 %v1656
    %vm1694 = vweird.f32 %v1687
    %vm1695 = vmor %vm1693, %vm1694
    %v1696 = vsel %vm1695, %v1687, %v1692
    %v1701 = vrot.slane %v1676, 7
    %v1702 = vrot.slane %v1686, 6
    %v1703 = vrot.slane %v1696, 5
    %v1704 = vsel %vm509, %v1666, %v1701
    %v1705 = vsel %vm511, %v1702, %v1703
    %v1706 = vsel %vm513, %v1704, %v1705
    %v1708 = vmul.f32 %v1644, %v1706
    %v1709 = vld [vmem:[%s8] sm:$0xf]
    %v1711 = vperm.slane %v1708, 0
    %v1712 = vperm.slane %v1708, 1
    %v1713 = vperm.slane %v1708, 2
    %v1714 = vperm.slane %v1708, 3
    %v1719 = vmul.f32 %v1600, %v1711
    %v1720 = vmul.f32 %v1601, %v1712
    %v1721 = vmul.f32 %v1602, %v1713
    %v1722 = vmul.f32 %v1603, %v1714
    %v1727 = vrot.slane %v1720, 7
    %v1728 = vrot.slane %v1721, 6
    %v1729 = vrot.slane %v1722, 5
    %v1730 = vsel %vm509, %v1719, %v1727
    %v1731 = vsel %vm511, %v1728, %v1729
    %v1732 = vsel %vm513, %v1730, %v1731
    %v1734 = vsub.f32 %v1709, %v1732
    %v1735 = vmul.f32 %v1400, %v1711
    %v1736 = vmul.f32 %v1456, %v1712
    %v1737 = vmul.f32 %v1512, %v1713
    %v1738 = vmul.f32 %v1568, %v1714
    %v1739 = vmul.f32 %v1402, %v1711
    %v1740 = vmul.f32 %v1458, %v1712
    %v1741 = vmul.f32 %v1514, %v1713
    %v1742 = vmul.f32 %v1570, %v1714
    %v1744 = vperm.slane %v1734, 0
    %v1745 = vperm.slane %v1734, 1
    %v1746 = vperm.slane %v1734, 2
    %v1747 = vperm.slane %v1734, 3
    %v1752 = vadd.f32 %v1735, %v1744
    %v1753 = vadd.f32 %v1736, %v1745
    %v1754 = vadd.f32 %v1737, %v1746
    %v1755 = vadd.f32 %v1738, %v1747
    %v1756 = vadd.f32 %v1739, %v1744
    %v1757 = vadd.f32 %v1740, %v1745
    %v1758 = vadd.f32 %v1741, %v1746
    %v1759 = vadd.f32 %v1742, %v1747
    %v1760 = vmax.f32 %v1752, 0.0
    %v1761 = vmax.f32 %v1753, 0.0
    %v1762 = vmax.f32 %v1754, 0.0
    %v1763 = vmax.f32 %v1755, 0.0
    %v1764 = vmax.f32 %v1756, 0.0
    %v1765 = vmax.f32 %v1757, 0.0
    %v1766 = vmax.f32 %v1758, 0.0
    %v1767 = vmax.f32 %v1759, 0.0
    %v1768 = vpack.c.bf16 %v1764, %v1760
    %v1769 = vpack.c.bf16 %v1765, %v1761
    %v1770 = vpack.c.bf16 %v1766, %v1762
    %v1771 = vpack.c.bf16 %v1767, %v1763
    %v1772 = vld [vmem:[#allocation4] sm:$0xff]
    %v1773 = vld [vmem:[#allocation4 + $0x8] sm:$0xff]
    %v1774 = vld [vmem:[#allocation4 + $0x10] sm:$0xff]
    %v1775 = vld [vmem:[#allocation4 + $0x18] sm:$0xff]
    %v1776 = vld [vmem:[#allocation4 + $0x20] sm:$0xff]
    %v1777 = vld [vmem:[#allocation4 + $0x28] sm:$0xff]
    %v1778 = vld [vmem:[#allocation4 + $0x30] sm:$0xff]
    %v1779 = vld [vmem:[#allocation4 + $0x38] sm:$0xff]
    %v1780 = vld [vmem:[#allocation4 + $0x40] sm:$0xff]
    %v1781 = vld [vmem:[#allocation4 + $0x48] sm:$0xff]
    %v1782 = vld [vmem:[#allocation4 + $0x50] sm:$0xff]
    %v1783 = vld [vmem:[#allocation4 + $0x58] sm:$0xff]
    %v1784 = vld [vmem:[#allocation4 + $0x60] sm:$0xff]
    %v1785 = vld [vmem:[#allocation4 + $0x68] sm:$0xff]
    %v1786 = vld [vmem:[#allocation4 + $0x70] sm:$0xff]
    %v1787 = vld [vmem:[#allocation4 + $0x78] sm:$0xff]
    %v1788 = vld [vmem:[#allocation4 + $0x80] sm:$0xff]
    %v1789 = vld [vmem:[#allocation4 + $0x88] sm:$0xff]
    %v1790 = vld [vmem:[#allocation4 + $0x90] sm:$0xff]
    %v1791 = vld [vmem:[#allocation4 + $0x98] sm:$0xff]
    %v1792 = vld [vmem:[#allocation4 + $0xa0] sm:$0xff]
    %v1793 = vld [vmem:[#allocation4 + $0xa8] sm:$0xff]
    %v1794 = vld [vmem:[#allocation4 + $0xb0] sm:$0xff]
    %v1795 = vld [vmem:[#allocation4 + $0xb8] sm:$0xff]
    %v1796 = vld [vmem:[#allocation4 + $0xc0] sm:$0xff]
    %v1797 = vld [vmem:[#allocation4 + $0xc8] sm:$0xff]
    %v1798 = vld [vmem:[#allocation4 + $0xd0] sm:$0xff]
    %v1799 = vld [vmem:[#allocation4 + $0xd8] sm:$0xff]
    %v1800 = vld [vmem:[#allocation4 + $0xe0] sm:$0xff]
    %v1801 = vld [vmem:[#allocation4 + $0xe8] sm:$0xff]
    %v1802 = vld [vmem:[#allocation4 + $0xf0] sm:$0xff]
    %v1803 = vld [vmem:[#allocation4 + $0xf8] sm:$0xff]
    %v1804 = vld [vmem:[#allocation4 + $0x100] sm:$0xff]
    %v1805 = vld [vmem:[#allocation4 + $0x108] sm:$0xff]
    %v1806 = vld [vmem:[#allocation4 + $0x110] sm:$0xff]
    %v1807 = vld [vmem:[#allocation4 + $0x118] sm:$0xff]
    %v1808 = vld [vmem:[#allocation4 + $0x120] sm:$0xff]
    %v1809 = vld [vmem:[#allocation4 + $0x128] sm:$0xff]
    %v1810 = vld [vmem:[#allocation4 + $0x130] sm:$0xff]
    %v1811 = vld [vmem:[#allocation4 + $0x138] sm:$0xff]
    %v1812 = vld [vmem:[#allocation4 + $0x140] sm:$0xff]
    %v1813 = vld [vmem:[#allocation4 + $0x148] sm:$0xff]
    %v1814 = vld [vmem:[#allocation4 + $0x150] sm:$0xff]
    %v1815 = vld [vmem:[#allocation4 + $0x158] sm:$0xff]
    %v1816 = vld [vmem:[#allocation4 + $0x160] sm:$0xff]
    %v1817 = vld [vmem:[#allocation4 + $0x168] sm:$0xff]
    %v1818 = vld [vmem:[#allocation4 + $0x170] sm:$0xff]
    %v1819 = vld [vmem:[#allocation4 + $0x178] sm:$0xff]
    %v1820 = vld [vmem:[#allocation4 + $0x180] sm:$0xff]
    %v1821 = vld [vmem:[#allocation4 + $0x188] sm:$0xff]
    %v1822 = vld [vmem:[#allocation4 + $0x190] sm:$0xff]
    %v1823 = vld [vmem:[#allocation4 + $0x198] sm:$0xff]
    %v1824 = vld [vmem:[#allocation4 + $0x1a0] sm:$0xff]
    %v1825 = vld [vmem:[#allocation4 + $0x1a8] sm:$0xff]
    %v1826 = vld [vmem:[#allocation4 + $0x1b0] sm:$0xff]
    %v1827 = vld [vmem:[#allocation4 + $0x1b8] sm:$0xff]
    %v1828 = vld [vmem:[#allocation4 + $0x1c0] sm:$0xff]
    %v1829 = vld [vmem:[#allocation4 + $0x1c8] sm:$0xff]
    %v1830 = vld [vmem:[#allocation4 + $0x1d0] sm:$0xff]
    %v1831 = vld [vmem:[#allocation4 + $0x1d8] sm:$0xff]
    %v1832 = vld [vmem:[#allocation4 + $0x1e0] sm:$0xff]
    %v1833 = vld [vmem:[#allocation4 + $0x1e8] sm:$0xff]
    %v1834 = vld [vmem:[#allocation4 + $0x1f0] sm:$0xff]
    %v1835 = vld [vmem:[#allocation4 + $0x1f8] sm:$0xff]
    %v1836 = vld [vmem:[#allocation4 + $0x200] sm:$0xff]
    %v1837 = vld [vmem:[#allocation4 + $0x208] sm:$0xff]
    %v1838 = vld [vmem:[#allocation4 + $0x210] sm:$0xff]
    %v1839 = vld [vmem:[#allocation4 + $0x218] sm:$0xff]
    %v1840 = vld [vmem:[#allocation4 + $0x220] sm:$0xff]
    %v1841 = vld [vmem:[#allocation4 + $0x228] sm:$0xff]
    %v1842 = vld [vmem:[#allocation4 + $0x230] sm:$0xff]
    %v1843 = vld [vmem:[#allocation4 + $0x238] sm:$0xff]
    %v1844 = vld [vmem:[#allocation4 + $0x240] sm:$0xff]
    %v1845 = vld [vmem:[#allocation4 + $0x248] sm:$0xff]
    %v1846 = vld [vmem:[#allocation4 + $0x250] sm:$0xff]
    %v1847 = vld [vmem:[#allocation4 + $0x258] sm:$0xff]
    %v1848 = vld [vmem:[#allocation4 + $0x260] sm:$0xff]
    %v1849 = vld [vmem:[#allocation4 + $0x268] sm:$0xff]
    %v1850 = vld [vmem:[#allocation4 + $0x270] sm:$0xff]
    %v1851 = vld [vmem:[#allocation4 + $0x278] sm:$0xff]
    %v1852 = vld [vmem:[#allocation4 + $0x280] sm:$0xff]
    %v1853 = vld [vmem:[#allocation4 + $0x288] sm:$0xff]
    %v1854 = vld [vmem:[#allocation4 + $0x290] sm:$0xff]
    %v1855 = vld [vmem:[#allocation4 + $0x298] sm:$0xff]
    %v1856 = vld [vmem:[#allocation4 + $0x2a0] sm:$0xff]
    %v1857 = vld [vmem:[#allocation4 + $0x2a8] sm:$0xff]
    %v1858 = vld [vmem:[#allocation4 + $0x2b0] sm:$0xff]
    %v1859 = vld [vmem:[#allocation4 + $0x2b8] sm:$0xff]
    %v1860 = vld [vmem:[#allocation4 + $0x2c0] sm:$0xff]
    %v1861 = vld [vmem:[#allocation4 + $0x2c8] sm:$0xff]
    %v1862 = vld [vmem:[#allocation4 + $0x2d0] sm:$0xff]
    %v1863 = vld [vmem:[#allocation4 + $0x2d8] sm:$0xff]
    %v1864 = vld [vmem:[#allocation4 + $0x2e0] sm:$0xff]
    %v1865 = vld [vmem:[#allocation4 + $0x2e8] sm:$0xff]
    %v1866 = vld [vmem:[#allocation4 + $0x2f0] sm:$0xff]
    %v1867 = vld [vmem:[#allocation4 + $0x2f8] sm:$0xff]
    %v1868 = vld [vmem:[#allocation4 + $0x300] sm:$0xff]
    %v1869 = vld [vmem:[#allocation4 + $0x308] sm:$0xff]
    %v1870 = vld [vmem:[#allocation4 + $0x310] sm:$0xff]
    %v1871 = vld [vmem:[#allocation4 + $0x318] sm:$0xff]
    %v1872 = vld [vmem:[#allocation4 + $0x320] sm:$0xff]
    %v1873 = vld [vmem:[#allocation4 + $0x328] sm:$0xff]
    %v1874 = vld [vmem:[#allocation4 + $0x330] sm:$0xff]
    %v1875 = vld [vmem:[#allocation4 + $0x338] sm:$0xff]
    %v1876 = vld [vmem:[#allocation4 + $0x340] sm:$0xff]
    %v1877 = vld [vmem:[#allocation4 + $0x348] sm:$0xff]
    %v1878 = vld [vmem:[#allocation4 + $0x350] sm:$0xff]
    %v1879 = vld [vmem:[#allocation4 + $0x358] sm:$0xff]
    %v1880 = vld [vmem:[#allocation4 + $0x360] sm:$0xff]
    %v1881 = vld [vmem:[#allocation4 + $0x368] sm:$0xff]
    %v1882 = vld [vmem:[#allocation4 + $0x370] sm:$0xff]
    %v1883 = vld [vmem:[#allocation4 + $0x378] sm:$0xff]
    %v1884 = vld [vmem:[#allocation4 + $0x380] sm:$0xff]
    %v1885 = vld [vmem:[#allocation4 + $0x388] sm:$0xff]
    %v1886 = vld [vmem:[#allocation4 + $0x390] sm:$0xff]
    %v1887 = vld [vmem:[#allocation4 + $0x398] sm:$0xff]
    %v1888 = vld [vmem:[#allocation4 + $0x3a0] sm:$0xff]
    %v1889 = vld [vmem:[#allocation4 + $0x3a8] sm:$0xff]
    %v1890 = vld [vmem:[#allocation4 + $0x3b0] sm:$0xff]
    %v1891 = vld [vmem:[#allocation4 + $0x3b8] sm:$0xff]
    %v1892 = vld [vmem:[#allocation4 + $0x3c0] sm:$0xff]
    %v1893 = vld [vmem:[#allocation4 + $0x3c8] sm:$0xff]
    %v1894 = vld [vmem:[#allocation4 + $0x3d0] sm:$0xff]
    %v1895 = vld [vmem:[#allocation4 + $0x3d8] sm:$0xff]
    %v1896 = vld [vmem:[#allocation4 + $0x3e0] sm:$0xff]
    %v1897 = vld [vmem:[#allocation4 + $0x3e8] sm:$0xff]
    %v1898 = vld [vmem:[#allocation4 + $0x3f0] sm:$0xff]
    %v1899 = vld [vmem:[#allocation4 + $0x3f8] sm:$0xff]
    %v2028 = vunpack.c.l.b16 %v1772
    %v2029 = vunpack.c.h.b16 %v1772
    %v2030 = vunpack.c.l.b16 %v1773
    %v2031 = vunpack.c.h.b16 %v1773
    %v2032 = vunpack.c.l.b16 %v1774
    %v2033 = vunpack.c.h.b16 %v1774
    %v2034 = vunpack.c.l.b16 %v1775
    %v2035 = vunpack.c.h.b16 %v1775
    %v2036 = vunpack.c.l.b16 %v1776
    %v2037 = vunpack.c.h.b16 %v1776
    %v2038 = vunpack.c.l.b16 %v1777
    %v2039 = vunpack.c.h.b16 %v1777
    %v2040 = vunpack.c.l.b16 %v1778
    %v2041 = vunpack.c.h.b16 %v1778
    %v2042 = vunpack.c.l.b16 %v1779
    %v2043 = vunpack.c.h.b16 %v1779
    %v2044 = vunpack.c.l.b16 %v1780
    %v2045 = vunpack.c.h.b16 %v1780
    %v2046 = vunpack.c.l.b16 %v1781
    %v2047 = vunpack.c.h.b16 %v1781
    %v2048 = vunpack.c.l.b16 %v1782
    %v2049 = vunpack.c.h.b16 %v1782
    %v2050 = vunpack.c.l.b16 %v1783
    %v2051 = vunpack.c.h.b16 %v1783
    %v2052 = vunpack.c.l.b16 %v1784
    %v2053 = vunpack.c.h.b16 %v1784
    %v2054 = vunpack.c.l.b16 %v1785
    %v2055 = vunpack.c.h.b16 %v1785
    %v2056 = vunpack.c.l.b16 %v1786
    %v2057 = vunpack.c.h.b16 %v1786
    %v2058 = vunpack.c.l.b16 %v1787
    %v2059 = vunpack.c.h.b16 %v1787
    %v2060 = vunpack.c.l.b16 %v1788
    %v2061 = vunpack.c.h.b16 %v1788
    %v2062 = vunpack.c.l.b16 %v1789
    %v2063 = vunpack.c.h.b16 %v1789
    %v2064 = vunpack.c.l.b16 %v1790
    %v2065 = vunpack.c.h.b16 %v1790
    %v2066 = vunpack.c.l.b16 %v1791
    %v2067 = vunpack.c.h.b16 %v1791
    %v2068 = vunpack.c.l.b16 %v1792
    %v2069 = vunpack.c.h.b16 %v1792
    %v2070 = vunpack.c.l.b16 %v1793
    %v2071 = vunpack.c.h.b16 %v1793
    %v2072 = vunpack.c.l.b16 %v1794
    %v2073 = vunpack.c.h.b16 %v1794
    %v2074 = vunpack.c.l.b16 %v1795
    %v2075 = vunpack.c.h.b16 %v1795
    %v2076 = vunpack.c.l.b16 %v1796
    %v2077 = vunpack.c.h.b16 %v1796
    %v2078 = vunpack.c.l.b16 %v1797
    %v2079 = vunpack.c.h.b16 %v1797
    %v2080 = vunpack.c.l.b16 %v1798
    %v2081 = vunpack.c.h.b16 %v1798
    %v2082 = vunpack.c.l.b16 %v1799
    %v2083 = vunpack.c.h.b16 %v1799
    %v2084 = vunpack.c.l.b16 %v1800
    %v2085 = vunpack.c.h.b16 %v1800
    %v2086 = vunpack.c.l.b16 %v1801
    %v2087 = vunpack.c.h.b16 %v1801
    %v2088 = vunpack.c.l.b16 %v1802
    %v2089 = vunpack.c.h.b16 %v1802
    %v2090 = vunpack.c.l.b16 %v1803
    %v2091 = vunpack.c.h.b16 %v1803
    %v2092 = vunpack.c.l.b16 %v1804
    %v2093 = vunpack.c.h.b16 %v1804
    %v2094 = vunpack.c.l.b16 %v1805
    %v2095 = vunpack.c.h.b16 %v1805
    %v2096 = vunpack.c.l.b16 %v1806
    %v2097 = vunpack.c.h.b16 %v1806
    %v2098 = vunpack.c.l.b16 %v1807
    %v2099 = vunpack.c.h.b16 %v1807
    %v2100 = vunpack.c.l.b16 %v1808
    %v2101 = vunpack.c.h.b16 %v1808
    %v2102 = vunpack.c.l.b16 %v1809
    %v2103 = vunpack.c.h.b16 %v1809
    %v2104 = vunpack.c.l.b16 %v1810
    %v2105 = vunpack.c.h.b16 %v1810
    %v2106 = vunpack.c.l.b16 %v1811
    %v2107 = vunpack.c.h.b16 %v1811
    %v2108 = vunpack.c.l.b16 %v1812
    %v2109 = vunpack.c.h.b16 %v1812
    %v2110 = vunpack.c.l.b16 %v1813
    %v2111 = vunpack.c.h.b16 %v1813
    %v2112 = vunpack.c.l.b16 %v1814
    %v2113 = vunpack.c.h.b16 %v1814
    %v2114 = vunpack.c.l.b16 %v1815
    %v2115 = vunpack.c.h.b16 %v1815
    %v2116 = vunpack.c.l.b16 %v1816
    %v2117 = vunpack.c.h.b16 %v1816
    %v2118 = vunpack.c.l.b16 %v1817
    %v2119 = vunpack.c.h.b16 %v1817
    %v2120 = vunpack.c.l.b16 %v1818
    %v2121 = vunpack.c.h.b16 %v1818
    %v2122 = vunpack.c.l.b16 %v1819
    %v2123 = vunpack.c.h.b16 %v1819
    %v2124 = vunpack.c.l.b16 %v1820
    %v2125 = vunpack.c.h.b16 %v1820
    %v2126 = vunpack.c.l.b16 %v1821
    %v2127 = vunpack.c.h.b16 %v1821
    %v2128 = vunpack.c.l.b16 %v1822
    %v2129 = vunpack.c.h.b16 %v1822
    %v2130 = vunpack.c.l.b16 %v1823
    %v2131 = vunpack.c.h.b16 %v1823
    %v2132 = vunpack.c.l.b16 %v1824
    %v2133 = vunpack.c.h.b16 %v1824
    %v2134 = vunpack.c.l.b16 %v1825
    %v2135 = vunpack.c.h.b16 %v1825
    %v2136 = vunpack.c.l.b16 %v1826
    %v2137 = vunpack.c.h.b16 %v1826
    %v2138 = vunpack.c.l.b16 %v1827
    %v2139 = vunpack.c.h.b16 %v1827
    %v2140 = vunpack.c.l.b16 %v1828
    %v2141 = vunpack.c.h.b16 %v1828
    %v2142 = vunpack.c.l.b16 %v1829
    %v2143 = vunpack.c.h.b16 %v1829
    %v2144 = vunpack.c.l.b16 %v1830
    %v2145 = vunpack.c.h.b16 %v1830
    %v2146 = vunpack.c.l.b16 %v1831
    %v2147 = vunpack.c.h.b16 %v1831
    %v2148 = vunpack.c.l.b16 %v1832
    %v2149 = vunpack.c.h.b16 %v1832
    %v2150 = vunpack.c.l.b16 %v1833
    %v2151 = vunpack.c.h.b16 %v1833
    %v2152 = vunpack.c.l.b16 %v1834
    %v2153 = vunpack.c.h.b16 %v1834
    %v2154 = vunpack.c.l.b16 %v1835
    %v2155 = vunpack.c.h.b16 %v1835
    %v2156 = vunpack.c.l.b16 %v1836
    %v2157 = vunpack.c.h.b16 %v1836
    %v2158 = vunpack.c.l.b16 %v1837
    %v2159 = vunpack.c.h.b16 %v1837
    %v2160 = vunpack.c.l.b16 %v1838
    %v2161 = vunpack.c.h.b16 %v1838
    %v2162 = vunpack.c.l.b16 %v1839
    %v2163 = vunpack.c.h.b16 %v1839
    %v2164 = vunpack.c.l.b16 %v1840
    %v2165 = vunpack.c.h.b16 %v1840
    %v2166 = vunpack.c.l.b16 %v1841
    %v2167 = vunpack.c.h.b16 %v1841
    %v2168 = vunpack.c.l.b16 %v1842
    %v2169 = vunpack.c.h.b16 %v1842
    %v2170 = vunpack.c.l.b16 %v1843
    %v2171 = vunpack.c.h.b16 %v1843
    %v2172 = vunpack.c.l.b16 %v1844
    %v2173 = vunpack.c.h.b16 %v1844
    %v2174 = vunpack.c.l.b16 %v1845
    %v2175 = vunpack.c.h.b16 %v1845
    %v2176 = vunpack.c.l.b16 %v1846
    %v2177 = vunpack.c.h.b16 %v1846
    %v2178 = vunpack.c.l.b16 %v1847
    %v2179 = vunpack.c.h.b16 %v1847
    %v2180 = vunpack.c.l.b16 %v1848
    %v2181 = vunpack.c.h.b16 %v1848
    %v2182 = vunpack.c.l.b16 %v1849
    %v2183 = vunpack.c.h.b16 %v1849
    %v2184 = vunpack.c.l.b16 %v1850
    %v2185 = vunpack.c.h.b16 %v1850
    %v2186 = vunpack.c.l.b16 %v1851
    %v2187 = vunpack.c.h.b16 %v1851
    %v2188 = vunpack.c.l.b16 %v1852
    %v2189 = vunpack.c.h.b16 %v1852
    %v2190 = vunpack.c.l.b16 %v1853
    %v2191 = vunpack.c.h.b16 %v1853
    %v2192 = vunpack.c.l.b16 %v1854
    %v2193 = vunpack.c.h.b16 %v1854
    %v2194 = vunpack.c.l.b16 %v1855
    %v2195 = vunpack.c.h.b16 %v1855
    %v2196 = vunpack.c.l.b16 %v1856
    %v2197 = vunpack.c.h.b16 %v1856
    %v2198 = vunpack.c.l.b16 %v1857
    %v2199 = vunpack.c.h.b16 %v1857
    %v2200 = vunpack.c.l.b16 %v1858
    %v2201 = vunpack.c.h.b16 %v1858
    %v2202 = vunpack.c.l.b16 %v1859
    %v2203 = vunpack.c.h.b16 %v1859
    %v2204 = vunpack.c.l.b16 %v1860
    %v2205 = vunpack.c.h.b16 %v1860
    %v2206 = vunpack.c.l.b16 %v1861
    %v2207 = vunpack.c.h.b16 %v1861
    %v2208 = vunpack.c.l.b16 %v1862
    %v2209 = vunpack.c.h.b16 %v1862
    %v2210 = vunpack.c.l.b16 %v1863
    %v2211 = vunpack.c.h.b16 %v1863
    %v2212 = vunpack.c.l.b16 %v1864
    %v2213 = vunpack.c.h.b16 %v1864
    %v2214 = vunpack.c.l.b16 %v1865
    %v2215 = vunpack.c.h.b16 %v1865
    %v2216 = vunpack.c.l.b16 %v1866
    %v2217 = vunpack.c.h.b16 %v1866
    %v2218 = vunpack.c.l.b16 %v1867
    %v2219 = vunpack.c.h.b16 %v1867
    %v2220 = vunpack.c.l.b16 %v1868
    %v2221 = vunpack.c.h.b16 %v1868
    %v2222 = vunpack.c.l.b16 %v1869
    %v2223 = vunpack.c.h.b16 %v1869
    %v2224 = vunpack.c.l.b16 %v1870
    %v2225 = vunpack.c.h.b16 %v1870
    %v2226 = vunpack.c.l.b16 %v1871
    %v2227 = vunpack.c.h.b16 %v1871
    %v2228 = vunpack.c.l.b16 %v1872
    %v2229 = vunpack.c.h.b16 %v1872
    %v2230 = vunpack.c.l.b16 %v1873
    %v2231 = vunpack.c.h.b16 %v1873
    %v2232 = vunpack.c.l.b16 %v1874
    %v2233 = vunpack.c.h.b16 %v1874
    %v2234 = vunpack.c.l.b16 %v1875
    %v2235 = vunpack.c.h.b16 %v1875
    %v2236 = vunpack.c.l.b16 %v1876
    %v2237 = vunpack.c.h.b16 %v1876
    %v2238 = vunpack.c.l.b16 %v1877
    %v2239 = vunpack.c.h.b16 %v1877
    %v2240 = vunpack.c.l.b16 %v1878
    %v2241 = vunpack.c.h.b16 %v1878
    %v2242 = vunpack.c.l.b16 %v1879
    %v2243 = vunpack.c.h.b16 %v1879
    %v2244 = vunpack.c.l.b16 %v1880
    %v2245 = vunpack.c.h.b16 %v1880
    %v2246 = vunpack.c.l.b16 %v1881
    %v2247 = vunpack.c.h.b16 %v1881
    %v2248 = vunpack.c.l.b16 %v1882
    %v2249 = vunpack.c.h.b16 %v1882
    %v2250 = vunpack.c.l.b16 %v1883
    %v2251 = vunpack.c.h.b16 %v1883
    %v2252 = vunpack.c.l.b16 %v1884
    %v2253 = vunpack.c.h.b16 %v1884
    %v2254 = vunpack.c.l.b16 %v1885
    %v2255 = vunpack.c.h.b16 %v1885
    %v2256 = vunpack.c.l.b16 %v1886
    %v2257 = vunpack.c.h.b16 %v1886
    %v2258 = vunpack.c.l.b16 %v1887
    %v2259 = vunpack.c.h.b16 %v1887
    %v2260 = vunpack.c.l.b16 %v1888
    %v2261 = vunpack.c.h.b16 %v1888
    %v2262 = vunpack.c.l.b16 %v1889
    %v2263 = vunpack.c.h.b16 %v1889
    %v2264 = vunpack.c.l.b16 %v1890
    %v2265 = vunpack.c.h.b16 %v1890
    %v2266 = vunpack.c.l.b16 %v1891
    %v2267 = vunpack.c.h.b16 %v1891
    %v2268 = vunpack.c.l.b16 %v1892
    %v2269 = vunpack.c.h.b16 %v1892
    %v2270 = vunpack.c.l.b16 %v1893
    %v2271 = vunpack.c.h.b16 %v1893
    %v2272 = vunpack.c.l.b16 %v1894
    %v2273 = vunpack.c.h.b16 %v1894
    %v2274 = vunpack.c.l.b16 %v1895
    %v2275 = vunpack.c.h.b16 %v1895
    %v2276 = vunpack.c.l.b16 %v1896
    %v2277 = vunpack.c.h.b16 %v1896
    %v2278 = vunpack.c.l.b16 %v1897
    %v2279 = vunpack.c.h.b16 %v1897
    %v2280 = vunpack.c.l.b16 %v1898
    %v2281 = vunpack.c.h.b16 %v1898
    %v2282 = vunpack.c.l.b16 %v1899
    %v2283 = vunpack.c.h.b16 %v1899
    %v2284 = vpack.c.b16 %v2032, %v2028
    %v2285 = vpack.c.b16 %v2033, %v2029
    %v2286 = vpack.c.b16 %v2034, %v2030
    %v2287 = vpack.c.b16 %v2035, %v2031
    %v2288 = vpack.c.b16 %v2040, %v2036
    %v2289 = vpack.c.b16 %v2041, %v2037
    %v2290 = vpack.c.b16 %v2042, %v2038
    %v2291 = vpack.c.b16 %v2043, %v2039
    %v2292 = vpack.c.b16 %v2048, %v2044
    %v2293 = vpack.c.b16 %v2049, %v2045
    %v2294 = vpack.c.b16 %v2050, %v2046
    %v2295 = vpack.c.b16 %v2051, %v2047
    %v2296 = vpack.c.b16 %v2056, %v2052
    %v2297 = vpack.c.b16 %v2057, %v2053
    %v2298 = vpack.c.b16 %v2058, %v2054
    %v2299 = vpack.c.b16 %v2059, %v2055
    %v2300 = vpack.c.b16 %v2064, %v2060
    %v2301 = vpack.c.b16 %v2065, %v2061
    %v2302 = vpack.c.b16 %v2066, %v2062
    %v2303 = vpack.c.b16 %v2067, %v2063
    %v2304 = vpack.c.b16 %v2072, %v2068
    %v2305 = vpack.c.b16 %v2073, %v2069
    %v2306 = vpack.c.b16 %v2074, %v2070
    %v2307 = vpack.c.b16 %v2075, %v2071
    %v2308 = vpack.c.b16 %v2080, %v2076
    %v2309 = vpack.c.b16 %v2081, %v2077
    %v2310 = vpack.c.b16 %v2082, %v2078
    %v2311 = vpack.c.b16 %v2083, %v2079
    %v2312 = vpack.c.b16 %v2088, %v2084
    %v2313 = vpack.c.b16 %v2089, %v2085
    %v2314 = vpack.c.b16 %v2090, %v2086
    %v2315 = vpack.c.b16 %v2091, %v2087
    %v2316 = vpack.c.b16 %v2096, %v2092
    %v2317 = vpack.c.b16 %v2097, %v2093
    %v2318 = vpack.c.b16 %v2098, %v2094
    %v2319 = vpack.c.b16 %v2099, %v2095
    %v2320 = vpack.c.b16 %v2104, %v2100
    %v2321 = vpack.c.b16 %v2105, %v2101
    %v2322 = vpack.c.b16 %v2106, %v2102
    %v2323 = vpack.c.b16 %v2107, %v2103
    %v2324 = vpack.c.b16 %v2112, %v2108
    %v2325 = vpack.c.b16 %v2113, %v2109
    %v2326 = vpack.c.b16 %v2114, %v2110
    %v2327 = vpack.c.b16 %v2115, %v2111
    %v2328 = vpack.c.b16 %v2120, %v2116
    %v2329 = vpack.c.b16 %v2121, %v2117
    %v2330 = vpack.c.b16 %v2122, %v2118
    %v2331 = vpack.c.b16 %v2123, %v2119
    %v2332 = vpack.c.b16 %v2128, %v2124
    %v2333 = vpack.c.b16 %v2129, %v2125
    %v2334 = vpack.c.b16 %v2130, %v2126
    %v2335 = vpack.c.b16 %v2131, %v2127
    %v2336 = vpack.c.b16 %v2136, %v2132
    %v2337 = vpack.c.b16 %v2137, %v2133
    %v2338 = vpack.c.b16 %v2138, %v2134
    %v2339 = vpack.c.b16 %v2139, %v2135
    %v2340 = vpack.c.b16 %v2144, %v2140
    %v2341 = vpack.c.b16 %v2145, %v2141
    %v2342 = vpack.c.b16 %v2146, %v2142
    %v2343 = vpack.c.b16 %v2147, %v2143
    %v2344 = vpack.c.b16 %v2152, %v2148
    %v2345 = vpack.c.b16 %v2153, %v2149
    %v2346 = vpack.c.b16 %v2154, %v2150
    %v2347 = vpack.c.b16 %v2155, %v2151
    %v2348 = vpack.c.b16 %v2160, %v2156
    %v2349 = vpack.c.b16 %v2161, %v2157
    %v2350 = vpack.c.b16 %v2162, %v2158
    %v2351 = vpack.c.b16 %v2163, %v2159
    %v2352 = vpack.c.b16 %v2168, %v2164
    %v2353 = vpack.c.b16 %v2169, %v2165
    %v2354 = vpack.c.b16 %v2170, %v2166
    %v2355 = vpack.c.b16 %v2171, %v2167
    %v2356 = vpack.c.b16 %v2176, %v2172
    %v2357 = vpack.c.b16 %v2177, %v2173
    %v2358 = vpack.c.b16 %v2178, %v2174
    %v2359 = vpack.c.b16 %v2179, %v2175
    %v2360 = vpack.c.b16 %v2184, %v2180
    %v2361 = vpack.c.b16 %v2185, %v2181
    %v2362 = vpack.c.b16 %v2186, %v2182
    %v2363 = vpack.c.b16 %v2187, %v2183
    %v2364 = vpack.c.b16 %v2192, %v2188
    %v2365 = vpack.c.b16 %v2193, %v2189
    %v2366 = vpack.c.b16 %v2194, %v2190
    %v2367 = vpack.c.b16 %v2195, %v2191
    %v2368 = vpack.c.b16 %v2200, %v2196
    %v2369 = vpack.c.b16 %v2201, %v2197
    %v2370 = vpack.c.b16 %v2202, %v2198
    %v2371 = vpack.c.b16 %v2203, %v2199
    %v2372 = vpack.c.b16 %v2208, %v2204
    %v2373 = vpack.c.b16 %v2209, %v2205
    %v2374 = vpack.c.b16 %v2210, %v2206
    %v2375 = vpack.c.b16 %v2211, %v2207
    %v2376 = vpack.c.b16 %v2216, %v2212
    %v2377 = vpack.c.b16 %v2217, %v2213
    %v2378 = vpack.c.b16 %v2218, %v2214
    %v2379 = vpack.c.b16 %v2219, %v2215
    %v2380 = vpack.c.b16 %v2224, %v2220
    %v2381 = vpack.c.b16 %v2225, %v2221
    %v2382 = vpack.c.b16 %v2226, %v2222
    %v2383 = vpack.c.b16 %v2227, %v2223
    %v2384 = vpack.c.b16 %v2232, %v2228
    %v2385 = vpack.c.b16 %v2233, %v2229
    %v2386 = vpack.c.b16 %v2234, %v2230
    %v2387 = vpack.c.b16 %v2235, %v2231
    %v2388 = vpack.c.b16 %v2240, %v2236
    %v2389 = vpack.c.b16 %v2241, %v2237
    %v2390 = vpack.c.b16 %v2242, %v2238
    %v2391 = vpack.c.b16 %v2243, %v2239
    %v2392 = vpack.c.b16 %v2248, %v2244
    %v2393 = vpack.c.b16 %v2249, %v2245
    %v2394 = vpack.c.b16 %v2250, %v2246
    %v2395 = vpack.c.b16 %v2251, %v2247
    %v2396 = vpack.c.b16 %v2256, %v2252
    %v2397 = vpack.c.b16 %v2257, %v2253
    %v2398 = vpack.c.b16 %v2258, %v2254
    %v2399 = vpack.c.b16 %v2259, %v2255
    %v2400 = vpack.c.b16 %v2264, %v2260
    %v2401 = vpack.c.b16 %v2265, %v2261
    %v2402 = vpack.c.b16 %v2266, %v2262
    %v2403 = vpack.c.b16 %v2267, %v2263
    %v2404 = vpack.c.b16 %v2272, %v2268
    %v2405 = vpack.c.b16 %v2273, %v2269
    %v2406 = vpack.c.b16 %v2274, %v2270
    %v2407 = vpack.c.b16 %v2275, %v2271
    %v2408 = vpack.c.b16 %v2280, %v2276
    %v2409 = vpack.c.b16 %v2281, %v2277
    %v2410 = vpack.c.b16 %v2282, %v2278
    %v2411 = vpack.c.b16 %v2283, %v2279
    %2540 = vmatpush.bf16.msra.mxu0 %v2312
    %2541 = vmatpush.bf16.msra.mxu0 %v2308
    %2542 = vmatpush.bf16.msra.mxu0 %v2304
    %2543 = vmatpush.bf16.msra.mxu0 %v2300
    %2544 = vmatpush.bf16.msra.mxu0 %v2296
    %2545 = vmatpush.bf16.msra.mxu0 %v2292
    %2546 = vmatpush.bf16.msra.mxu0 %v2288
    %2547 = vmatpush.bf16.msra.mxu0 %v2284
    %2548 = vmatmul.bf16.gmra.mxu0 %v1768
    %v2549 = vpop.f32.mrf.mxu0
    %v2550 = vadd.f32 0.0, %v2549
    %v2551 = vpop.f32.mrf.mxu0
    %v2552 = vadd.f32 0.0, %v2551
    %2553 = vdwg.mxu0
    %2554 = vmatpush.bf16.msra.mxu0 %v2344
    %2555 = vmatpush.bf16.msra.mxu0 %v2340
    %2556 = vmatpush.bf16.msra.mxu0 %v2336
    %2557 = vmatpush.bf16.msra.mxu0 %v2332
    %2558 = vmatpush.bf16.msra.mxu0 %v2328
    %2559 = vmatpush.bf16.msra.mxu0 %v2324
    %2560 = vmatpush.bf16.msra.mxu0 %v2320
    %2561 = vmatpush.bf16.msra.mxu0 %v2316
    %2562 = vmatmul.bf16.gmra.mxu0 %v1769
    %v2563 = vpop.f32.mrf.mxu0
    %v2564 = vadd.f32 %v2550, %v2563
    %v2565 = vpop.f32.mrf.mxu0
    %v2566 = vadd.f32 %v2552, %v2565
    %2567 = vdwg.mxu0
    %2568 = vmatpush.bf16.msra.mxu0 %v2376
    %2569 = vmatpush.bf16.msra.mxu0 %v2372
    %2570 = vmatpush.bf16.msra.mxu0 %v2368
    %2571 = vmatpush.bf16.msra.mxu0 %v2364
    %2572 = vmatpush.bf16.msra.mxu0 %v2360
    %2573 = vmatpush.bf16.msra.mxu0 %v2356
    %2574 = vmatpush.bf16.msra.mxu0 %v2352
    %2575 = vmatpush.bf16.msra.mxu0 %v2348
    %2576 = vmatmul.bf16.gmra.mxu0 %v1770
    %v2577 = vpop.f32.mrf.mxu0
    %v2578 = vadd.f32 %v2564, %v2577
    %v2579 = vpop.f32.mrf.mxu0
    %v2580 = vadd.f32 %v2566, %v2579
    %2581 = vdwg.mxu0
    %2582 = vmatpush.bf16.msra.mxu0 %v2408
    %2583 = vmatpush.bf16.msra.mxu0 %v2404
    %2584 = vmatpush.bf16.msra.mxu0 %v2400
    %2585 = vmatpush.bf16.msra.mxu0 %v2396
    %2586 = vmatpush.bf16.msra.mxu0 %v2392
    %2587 = vmatpush.bf16.msra.mxu0 %v2388
    %2588 = vmatpush.bf16.msra.mxu0 %v2384
    %2589 = vmatpush.bf16.msra.mxu0 %v2380
    %2590 = vmatmul.bf16.gmra.mxu0 %v1771
    %v2591 = vpop.f32.mrf.mxu0
    %v2592 = vadd.f32 %v2578, %v2591
    %v2593 = vpop.f32.mrf.mxu0
    %v2594 = vadd.f32 %v2580, %v2593
    %2595 = vdwg.mxu0
    %2596 = vmatpush.bf16.msra.mxu0 %v2313
    %2597 = vmatpush.bf16.msra.mxu0 %v2309
    %2598 = vmatpush.bf16.msra.mxu0 %v2305
    %2599 = vmatpush.bf16.msra.mxu0 %v2301
    %2600 = vmatpush.bf16.msra.mxu0 %v2297
    %2601 = vmatpush.bf16.msra.mxu0 %v2293
    %2602 = vmatpush.bf16.msra.mxu0 %v2289
    %2603 = vmatpush.bf16.msra.mxu0 %v2285
    %2604 = vmatmul.bf16.gmra.mxu0 %v1768
    %v2605 = vpop.f32.mrf.mxu0
    %v2606 = vadd.f32 0.0, %v2605
    %v2607 = vpop.f32.mrf.mxu0
    %v2608 = vadd.f32 0.0, %v2607
    %2609 = vdwg.mxu0
    %2610 = vmatpush.bf16.msra.mxu0 %v2345
    %2611 = vmatpush.bf16.msra.mxu0 %v2341
    %2612 = vmatpush.bf16.msra.mxu0 %v2337
    %2613 = vmatpush.bf16.msra.mxu0 %v2333
    %2614 = vmatpush.bf16.msra.mxu0 %v2329
    %2615 = vmatpush.bf16.msra.mxu0 %v2325
    %2616 = vmatpush.bf16.msra.mxu0 %v2321
    %2617 = vmatpush.bf16.msra.mxu0 %v2317
    %2618 = vmatmul.bf16.gmra.mxu0 %v1769
    %v2619 = vpop.f32.mrf.mxu0
    %v2620 = vadd.f32 %v2606, %v2619
    %v2621 = vpop.f32.mrf.mxu0
    %v2622 = vadd.f32 %v2608, %v2621
    %2623 = vdwg.mxu0
    %2624 = vmatpush.bf16.msra.mxu0 %v2377
    %2625 = vmatpush.bf16.msra.mxu0 %v2373
    %2626 = vmatpush.bf16.msra.mxu0 %v2369
    %2627 = vmatpush.bf16.msra.mxu0 %v2365
    %2628 = vmatpush.bf16.msra.mxu0 %v2361
    %2629 = vmatpush.bf16.msra.mxu0 %v2357
    %2630 = vmatpush.bf16.msra.mxu0 %v2353
    %2631 = vmatpush.bf16.msra.mxu0 %v2349
    %2632 = vmatmul.bf16.gmra.mxu0 %v1770
    %v2633 = vpop.f32.mrf.mxu0
    %v2634 = vadd.f32 %v2620, %v2633
    %v2635 = vpop.f32.mrf.mxu0
    %v2636 = vadd.f32 %v2622, %v2635
    %2637 = vdwg.mxu0
    %2638 = vmatpush.bf16.msra.mxu0 %v2409
    %2639 = vmatpush.bf16.msra.mxu0 %v2405
    %2640 = vmatpush.bf16.msra.mxu0 %v2401
    %2641 = vmatpush.bf16.msra.mxu0 %v2397
    %2642 = vmatpush.bf16.msra.mxu0 %v2393
    %2643 = vmatpush.bf16.msra.mxu0 %v2389
    %2644 = vmatpush.bf16.msra.mxu0 %v2385
    %2645 = vmatpush.bf16.msra.mxu0 %v2381
    %2646 = vmatmul.bf16.gmra.mxu0 %v1771
    %v2647 = vpop.f32.mrf.mxu0
    %v2648 = vadd.f32 %v2634, %v2647
    %v2649 = vpop.f32.mrf.mxu0
    %v2650 = vadd.f32 %v2636, %v2649
    %2651 = vdwg.mxu0
    %2652 = vmatpush.bf16.msra.mxu0 %v2314
    %2653 = vmatpush.bf16.msra.mxu0 %v2310
    %2654 = vmatpush.bf16.msra.mxu0 %v2306
    %2655 = vmatpush.bf16.msra.mxu0 %v2302
    %2656 = vmatpush.bf16.msra.mxu0 %v2298
    %2657 = vmatpush.bf16.msra.mxu0 %v2294
    %2658 = vmatpush.bf16.msra.mxu0 %v2290
    %2659 = vmatpush.bf16.msra.mxu0 %v2286
    %2660 = vmatmul.bf16.gmra.mxu0 %v1768
    %v2661 = vpop.f32.mrf.mxu0
    %v2662 = vadd.f32 0.0, %v2661
    %v2663 = vpop.f32.mrf.mxu0
    %v2664 = vadd.f32 0.0, %v2663
    %2665 = vdwg.mxu0
    %2666 = vmatpush.bf16.msra.mxu0 %v2346
    %2667 = vmatpush.bf16.msra.mxu0 %v2342
    %2668 = vmatpush.bf16.msra.mxu0 %v2338
    %2669 = vmatpush.bf16.msra.mxu0 %v2334
    %2670 = vmatpush.bf16.msra.mxu0 %v2330
    %2671 = vmatpush.bf16.msra.mxu0 %v2326
    %2672 = vmatpush.bf16.msra.mxu0 %v2322
    %2673 = vmatpush.bf16.msra.mxu0 %v2318
    %2674 = vmatmul.bf16.gmra.mxu0 %v1769
    %v2675 = vpop.f32.mrf.mxu0
    %v2676 = vadd.f32 %v2662, %v2675
    %v2677 = vpop.f32.mrf.mxu0
    %v2678 = vadd.f32 %v2664, %v2677
    %2679 = vdwg.mxu0
    %2680 = vmatpush.bf16.msra.mxu0 %v2378
    %2681 = vmatpush.bf16.msra.mxu0 %v2374
    %2682 = vmatpush.bf16.msra.mxu0 %v2370
    %2683 = vmatpush.bf16.msra.mxu0 %v2366
    %2684 = vmatpush.bf16.msra.mxu0 %v2362
    %2685 = vmatpush.bf16.msra.mxu0 %v2358
    %2686 = vmatpush.bf16.msra.mxu0 %v2354
    %2687 = vmatpush.bf16.msra.mxu0 %v2350
    %2688 = vmatmul.bf16.gmra.mxu0 %v1770
    %v2689 = vpop.f32.mrf.mxu0
    %v2690 = vadd.f32 %v2676, %v2689
    %v2691 = vpop.f32.mrf.mxu0
    %v2692 = vadd.f32 %v2678, %v2691
    %2693 = vdwg.mxu0
    %2694 = vmatpush.bf16.msra.mxu0 %v2410
    %2695 = vmatpush.bf16.msra.mxu0 %v2406
    %2696 = vmatpush.bf16.msra.mxu0 %v2402
    %2697 = vmatpush.bf16.msra.mxu0 %v2398
    %2698 = vmatpush.bf16.msra.mxu0 %v2394
    %2699 = vmatpush.bf16.msra.mxu0 %v2390
    %2700 = vmatpush.bf16.msra.mxu0 %v2386
    %2701 = vmatpush.bf16.msra.mxu0 %v2382
    %2702 = vmatmul.bf16.gmra.mxu0 %v1771
    %v2703 = vpop.f32.mrf.mxu0
    %v2704 = vadd.f32 %v2690, %v2703
    %v2705 = vpop.f32.mrf.mxu0
    %v2706 = vadd.f32 %v2692, %v2705
    %2707 = vdwg.mxu0
    %2708 = vmatpush.bf16.msra.mxu0 %v2315
    %2709 = vmatpush.bf16.msra.mxu0 %v2311
    %2710 = vmatpush.bf16.msra.mxu0 %v2307
    %2711 = vmatpush.bf16.msra.mxu0 %v2303
    %2712 = vmatpush.bf16.msra.mxu0 %v2299
    %2713 = vmatpush.bf16.msra.mxu0 %v2295
    %2714 = vmatpush.bf16.msra.mxu0 %v2291
    %2715 = vmatpush.bf16.msra.mxu0 %v2287
    %2716 = vmatmul.bf16.gmra.mxu0 %v1768
    %v2717 = vpop.f32.mrf.mxu0
    %v2718 = vadd.f32 0.0, %v2717
    %v2719 = vpop.f32.mrf.mxu0
    %v2720 = vadd.f32 0.0, %v2719
    %2721 = vdwg.mxu0
    %2722 = vmatpush.bf16.msra.mxu0 %v2347
    %2723 = vmatpush.bf16.msra.mxu0 %v2343
    %2724 = vmatpush.bf16.msra.mxu0 %v2339
    %2725 = vmatpush.bf16.msra.mxu0 %v2335
    %2726 = vmatpush.bf16.msra.mxu0 %v2331
    %2727 = vmatpush.bf16.msra.mxu0 %v2327
    %2728 = vmatpush.bf16.msra.mxu0 %v2323
    %2729 = vmatpush.bf16.msra.mxu0 %v2319
    %2730 = vmatmul.bf16.gmra.mxu0 %v1769
    %v2731 = vpop.f32.mrf.mxu0
    %v2732 = vadd.f32 %v2718, %v2731
    %v2733 = vpop.f32.mrf.mxu0
    %v2734 = vadd.f32 %v2720, %v2733
    %2735 = vdwg.mxu0
    %2736 = vmatpush.bf16.msra.mxu0 %v2379
    %2737 = vmatpush.bf16.msra.mxu0 %v2375
    %2738 = vmatpush.bf16.msra.mxu0 %v2371
    %2739 = vmatpush.bf16.msra.mxu0 %v2367
    %2740 = vmatpush.bf16.msra.mxu0 %v2363
    %2741 = vmatpush.bf16.msra.mxu0 %v2359
    %2742 = vmatpush.bf16.msra.mxu0 %v2355
    %2743 = vmatpush.bf16.msra.mxu0 %v2351
    %2744 = vmatmul.bf16.gmra.mxu0 %v1770
    %v2745 = vpop.f32.mrf.mxu0
    %v2746 = vadd.f32 %v2732, %v2745
    %v2747 = vpop.f32.mrf.mxu0
    %v2748 = vadd.f32 %v2734, %v2747
    %2749 = vdwg.mxu0
    %2750 = vmatpush.bf16.msra.mxu0 %v2411
    %2751 = vmatpush.bf16.msra.mxu0 %v2407
    %2752 = vmatpush.bf16.msra.mxu0 %v2403
    %2753 = vmatpush.bf16.msra.mxu0 %v2399
    %2754 = vmatpush.bf16.msra.mxu0 %v2395
    %2755 = vmatpush.bf16.msra.mxu0 %v2391
    %2756 = vmatpush.bf16.msra.mxu0 %v2387
    %2757 = vmatpush.bf16.msra.mxu0 %v2383
    %2758 = vmatmul.bf16.gmra.mxu0 %v1771
    %v2759 = vpop.f32.mrf.mxu0
    %v2760 = vadd.f32 %v2746, %v2759
    %v2761 = vpop.f32.mrf.mxu0
    %v2762 = vadd.f32 %v2748, %v2761
    %2763 = vdwg.mxu0
    %v2764 = vadd.f32 %v2592, %v2594
    %v2765 = vrot.slane %v2764, 4
    %v2766 = vadd.f32 %v2764, %v2765
    %v2767 = vrot.slane %v2766, 2
    %v2768 = vadd.f32 %v2766, %v2767
    %v2769 = vrot.slane %v2768, 1
    %v2770 = vadd.f32 %v2768, %v2769
    %v2771 = vadd.f32 %v2648, %v2650
    %v2772 = vrot.slane %v2771, 4
    %v2773 = vadd.f32 %v2771, %v2772
    %v2774 = vrot.slane %v2773, 2
    %v2775 = vadd.f32 %v2773, %v2774
    %v2776 = vrot.slane %v2775, 1
    %v2777 = vadd.f32 %v2775, %v2776
    %v2778 = vadd.f32 %v2704, %v2706
    %v2779 = vrot.slane %v2778, 4
    %v2780 = vadd.f32 %v2778, %v2779
    %v2781 = vrot.slane %v2780, 2
    %v2782 = vadd.f32 %v2780, %v2781
    %v2783 = vrot.slane %v2782, 1
    %v2784 = vadd.f32 %v2782, %v2783
    %v2785 = vadd.f32 %v2760, %v2762
    %v2786 = vrot.slane %v2785, 4
    %v2787 = vadd.f32 %v2785, %v2786
    %v2788 = vrot.slane %v2787, 2
    %v2789 = vadd.f32 %v2787, %v2788
    %v2790 = vrot.slane %v2789, 1
    %v2791 = vadd.f32 %v2789, %v2790
    %v2792 = vmul.f32 %v2770, 0.0625
    %v2793 = vmul.f32 %v2777, 0.0625
    %v2794 = vmul.f32 %v2784, 0.0625
    %v2795 = vmul.f32 %v2791, 0.0625
    %v2796 = vmul.f32 %v2592, %v2592
    %v2797 = vmul.f32 %v2648, %v2648
    %v2798 = vmul.f32 %v2704, %v2704
    %v2799 = vmul.f32 %v2760, %v2760
    %v2800 = vmul.f32 %v2594, %v2594
    %v2801 = vmul.f32 %v2650, %v2650
    %v2802 = vmul.f32 %v2706, %v2706
    %v2803 = vmul.f32 %v2762, %v2762
    %v2804 = vadd.f32 %v2796, %v2800
    %v2805 = vrot.slane %v2804, 4
    %v2806 = vadd.f32 %v2804, %v2805
    %v2807 = vrot.slane %v2806, 2
    %v2808 = vadd.f32 %v2806, %v2807
    %v2809 = vrot.slane %v2808, 1
    %v2810 = vadd.f32 %v2808, %v2809
    %v2811 = vadd.f32 %v2797, %v2801
    %v2812 = vrot.slane %v2811, 4
    %v2813 = vadd.f32 %v2811, %v2812
    %v2814 = vrot.slane %v2813, 2
    %v2815 = vadd.f32 %v2813, %v2814
    %v2816 = vrot.slane %v2815, 1
    %v2817 = vadd.f32 %v2815, %v2816
    %v2818 = vadd.f32 %v2798, %v2802
    %v2819 = vrot.slane %v2818, 4
    %v2820 = vadd.f32 %v2818, %v2819
    %v2821 = vrot.slane %v2820, 2
    %v2822 = vadd.f32 %v2820, %v2821
    %v2823 = vrot.slane %v2822, 1
    %v2824 = vadd.f32 %v2822, %v2823
    %v2825 = vadd.f32 %v2799, %v2803
    %v2826 = vrot.slane %v2825, 4
    %v2827 = vadd.f32 %v2825, %v2826
    %v2828 = vrot.slane %v2827, 2
    %v2829 = vadd.f32 %v2827, %v2828
    %v2830 = vrot.slane %v2829, 1
    %v2831 = vadd.f32 %v2829, %v2830
    %v2832 = vmul.f32 %v2810, 0.0625
    %v2833 = vmul.f32 %v2817, 0.0625
    %v2834 = vmul.f32 %v2824, 0.0625
    %v2835 = vmul.f32 %v2831, 0.0625
    %v2836 = vld [vmem:[%s10] sm:$0xf]
    %v2837 = vmul.f32 %v2792, %v2792
    %v2838 = vmul.f32 %v2793, %v2793
    %v2839 = vmul.f32 %v2794, %v2794
    %v2840 = vmul.f32 %v2795, %v2795
    %v2841 = vsub.f32 %v2832, %v2837
    %v2842 = vsub.f32 %v2833, %v2838
    %v2843 = vsub.f32 %v2834, %v2839
    %v2844 = vsub.f32 %v2835, %v2840
    %v2845 = vadd.f32 %v2841, 1e-05
    %v2846 = vadd.f32 %v2842, 1e-05
    %v2847 = vadd.f32 %v2843, 1e-05
    %v2848 = vadd.f32 %v2844, 1e-05
    %v2849 = vrsqrt.pop %v2845
    %v2850 = vmul.f32 %v2849, %v2845
    %v2851 = vmul.f32 %v2850, %v2849
    %v2852 = vmul.f32 0.5, %v2851
    %v2853 = vsub.f32 1.5, %v2852
    %v2854 = vmul.f32 %v2849, %v2853
    %vm2855 = vweird.f32 %v2845
    %vm2856 = vweird.f32 %v2849
    %vm2857 = vmor %vm2855, %vm2856
    %v2858 = vsel %vm2857, %v2849, %v2854
    %v2859 = vrsqrt.pop %v2846
    %v2860 = vmul.f32 %v2859, %v2846
    %v2861 = vmul.f32 %v2860, %v2859
    %v2862 = vmul.f32 0.5, %v2861
    %v2863 = vsub.f32 1.5, %v2862
    %v2864 = vmul.f32 %v2859, %v2863
    %vm2865 = vweird.f32 %v2846
    %vm2866 = vweird.f32 %v2859
    %vm2867 = vmor %vm2865, %vm2866
    %v2868 = vsel %vm2867, %v2859, %v2864
    %v2869 = vrsqrt.pop %v2847
    %v2870 = vmul.f32 %v2869, %v2847
    %v2871 = vmul.f32 %v2870, %v2869
    %v2872 = vmul.f32 0.5, %v2871
    %v2873 = vsub.f32 1.5, %v2872
    %v2874 = vmul.f32 %v2869, %v2873
    %vm2875 = vweird.f32 %v2847
    %vm2876 = vweird.f32 %v2869
    %vm2877 = vmor %vm2875, %vm2876
    %v2878 = vsel %vm2877, %v2869, %v2874
    %v2879 = vrsqrt.pop %v2848
    %v2880 = vmul.f32 %v2879, %v2848
    %v2881 = vmul.f32 %v2880, %v2879
    %v2882 = vmul.f32 0.5, %v2881
    %v2883 = vsub.f32 1.5, %v2882
    %v2884 = vmul.f32 %v2879, %v2883
    %vm2885 = vweird.f32 %v2848
    %vm2886 = vweird.f32 %v2879
    %vm2887 = vmor %vm2885, %vm2886
    %v2888 = vsel %vm2887, %v2879, %v2884
    %v2893 = vrot.slane %v2868, 7
    %v2894 = vrot.slane %v2878, 6
    %v2895 = vrot.slane %v2888, 5
    %v2896 = vsel %vm509, %v2858, %v2893
    %v2897 = vsel %vm511, %v2894, %v2895
    %v2898 = vsel %vm513, %v2896, %v2897
    %v2900 = vmul.f32 %v2836, %v2898
    %v2901 = vld [vmem:[%s11] sm:$0xf]
    %v2903 = vperm.slane %v2900, 0
    %v2904 = vperm.slane %v2900, 1
    %v2905 = vperm.slane %v2900, 2
    %v2906 = vperm.slane %v2900, 3
    %v2911 = vmul.f32 %v2792, %v2903
    %v2912 = vmul.f32 %v2793, %v2904
    %v2913 = vmul.f32 %v2794, %v2905
    %v2914 = vmul.f32 %v2795, %v2906
    %v2919 = vrot.slane %v2912, 7
    %v2920 = vrot.slane %v2913, 6
    %v2921 = vrot.slane %v2914, 5
    %v2922 = vsel %vm509, %v2911, %v2919
    %v2923 = vsel %vm511, %v2920, %v2921
    %v2924 = vsel %vm513, %v2922, %v2923
    %v2926 = vsub.f32 %v2901, %v2924
    %v2927 = vmul.f32 %v2592, %v2903
    %v2928 = vmul.f32 %v2648, %v2904
    %v2929 = vmul.f32 %v2704, %v2905
    %v2930 = vmul.f32 %v2760, %v2906
    %v2931 = vmul.f32 %v2594, %v2903
    %v2932 = vmul.f32 %v2650, %v2904
    %v2933 = vmul.f32 %v2706, %v2905
    %v2934 = vmul.f32 %v2762, %v2906
    %v2936 = vperm.slane %v2926, 0
    %v2937 = vperm.slane %v2926, 1
    %v2938 = vperm.slane %v2926, 2
    %v2939 = vperm.slane %v2926, 3
    %v2944 = vadd.f32 %v2927, %v2936
    %v2945 = vadd.f32 %v2928, %v2937
    %v2946 = vadd.f32 %v2929, %v2938
    %v2947 = vadd.f32 %v2930, %v2939
    %v2948 = vadd.f32 %v2931, %v2936
    %v2949 = vadd.f32 %v2932, %v2937
    %v2950 = vadd.f32 %v2933, %v2938
    %v2951 = vadd.f32 %v2934, %v2939
    %v2952 = vmax.f32 %v2944, 0.0
    %v2953 = vmax.f32 %v2945, 0.0
    %v2954 = vmax.f32 %v2946, 0.0
    %v2955 = vmax.f32 %v2947, 0.0
    %v2956 = vmax.f32 %v2948, 0.0
    %v2957 = vmax.f32 %v2949, 0.0
    %v2958 = vmax.f32 %v2950, 0.0
    %v2959 = vmax.f32 %v2951, 0.0
    %v2960 = vpack.c.bf16 %v2956, %v2952
    %v2961 = vpack.c.bf16 %v2957, %v2953
    %v2962 = vpack.c.bf16 %v2958, %v2954
    %v2963 = vpack.c.bf16 %v2959, %v2955
    %v2964 = vld [vmem:[%s12] sm:$0xf]
    %v2965 = vld [vmem:[%s12 + $0x4] sm:$0xf]
    %v2966 = vld [vmem:[%s12 + $0x8] sm:$0xf]
    %v2967 = vld [vmem:[%s12 + $0xc] sm:$0xf]
    %v2968 = vld [vmem:[%s12 + $0x10] sm:$0xf]
    %v2969 = vld [vmem:[%s12 + $0x14] sm:$0xf]
    %v2970 = vld [vmem:[%s12 + $0x18] sm:$0xf]
    %v2971 = vld [vmem:[%s12 + $0x1c] sm:$0xf]
    %v2972 = vld [vmem:[%s12 + $0x20] sm:$0xf]
    %v2973 = vld [vmem:[%s12 + $0x24] sm:$0xf]
    %v2974 = vld [vmem:[%s12 + $0x28] sm:$0xf]
    %v2975 = vld [vmem:[%s12 + $0x2c] sm:$0xf]
    %v2976 = vld [vmem:[%s12 + $0x30] sm:$0xf]
    %v2977 = vld [vmem:[%s12 + $0x34] sm:$0xf]
    %v2978 = vld [vmem:[%s12 + $0x38] sm:$0xf]
    %v2979 = vld [vmem:[%s12 + $0x3c] sm:$0xf]
    %v2980 = vld [vmem:[%s12 + $0x40] sm:$0xf]
    %v2981 = vld [vmem:[%s12 + $0x44] sm:$0xf]
    %v2982 = vld [vmem:[%s12 + $0x48] sm:$0xf]
    %v2983 = vld [vmem:[%s12 + $0x4c] sm:$0xf]
    %v2984 = vld [vmem:[%s12 + $0x50] sm:$0xf]
    %v2985 = vld [vmem:[%s12 + $0x54] sm:$0xf]
    %v2986 = vld [vmem:[%s12 + $0x58] sm:$0xf]
    %v2987 = vld [vmem:[%s12 + $0x5c] sm:$0xf]
    %v2988 = vld [vmem:[%s12 + $0x60] sm:$0xf]
    %v2989 = vld [vmem:[%s12 + $0x64] sm:$0xf]
    %v2990 = vld [vmem:[%s12 + $0x68] sm:$0xf]
    %v2991 = vld [vmem:[%s12 + $0x6c] sm:$0xf]
    %v2992 = vld [vmem:[%s12 + $0x70] sm:$0xf]
    %v2993 = vld [vmem:[%s12 + $0x74] sm:$0xf]
    %v2994 = vld [vmem:[%s12 + $0x78] sm:$0xf]
    %v2995 = vld [vmem:[%s12 + $0x7c] sm:$0xf]
    %v2996 = vld [vmem:[%s12 + $0x80] sm:$0xf]
    %v2997 = vld [vmem:[%s12 + $0x84] sm:$0xf]
    %v2998 = vld [vmem:[%s12 + $0x88] sm:$0xf]
    %v2999 = vld [vmem:[%s12 + $0x8c] sm:$0xf]
    %v3000 = vld [vmem:[%s12 + $0x90] sm:$0xf]
    %v3001 = vld [vmem:[%s12 + $0x94] sm:$0xf]
    %v3002 = vld [vmem:[%s12 + $0x98] sm:$0xf]
    %v3003 = vld [vmem:[%s12 + $0x9c] sm:$0xf]
    %v3004 = vld [vmem:[%s12 + $0xa0] sm:$0xf]
    %v3005 = vld [vmem:[%s12 + $0xa4] sm:$0xf]
    %v3006 = vld [vmem:[%s12 + $0xa8] sm:$0xf]
    %v3007 = vld [vmem:[%s12 + $0xac] sm:$0xf]
    %v3008 = vld [vmem:[%s12 + $0xb0] sm:$0xf]
    %v3009 = vld [vmem:[%s12 + $0xb4] sm:$0xf]
    %v3010 = vld [vmem:[%s12 + $0xb8] sm:$0xf]
    %v3011 = vld [vmem:[%s12 + $0xbc] sm:$0xf]
    %v3012 = vld [vmem:[%s12 + $0xc0] sm:$0xf]
    %v3013 = vld [vmem:[%s12 + $0xc4] sm:$0xf]
    %v3014 = vld [vmem:[%s12 + $0xc8] sm:$0xf]
    %v3015 = vld [vmem:[%s12 + $0xcc] sm:$0xf]
    %v3016 = vld [vmem:[%s12 + $0xd0] sm:$0xf]
    %v3017 = vld [vmem:[%s12 + $0xd4] sm:$0xf]
    %v3018 = vld [vmem:[%s12 + $0xd8] sm:$0xf]
    %v3019 = vld [vmem:[%s12 + $0xdc] sm:$0xf]
    %v3020 = vld [vmem:[%s12 + $0xe0] sm:$0xf]
    %v3021 = vld [vmem:[%s12 + $0xe4] sm:$0xf]
    %v3022 = vld [vmem:[%s12 + $0xe8] sm:$0xf]
    %v3023 = vld [vmem:[%s12 + $0xec] sm:$0xf]
    %v3024 = vld [vmem:[%s12 + $0xf0] sm:$0xf]
    %v3025 = vld [vmem:[%s12 + $0xf4] sm:$0xf]
    %v3026 = vld [vmem:[%s12 + $0xf8] sm:$0xf]
    %v3027 = vld [vmem:[%s12 + $0xfc] sm:$0xf]
    %v3028 = vld [vmem:[%s13] sm:$0x1]
    %v3030 = vperm.slane %v3028, 0
    %v3096 = vunpack.c.l.b16 %v2964
    %v3097 = vunpack.c.l.b16 %v2965
    %v3098 = vunpack.c.l.b16 %v2966
    %v3099 = vunpack.c.l.b16 %v2967
    %v3100 = vunpack.c.l.b16 %v2968
    %v3101 = vunpack.c.l.b16 %v2969
    %v3102 = vunpack.c.l.b16 %v2970
    %v3103 = vunpack.c.l.b16 %v2971
    %v3104 = vunpack.c.l.b16 %v2972
    %v3105 = vunpack.c.l.b16 %v2973
    %v3106 = vunpack.c.l.b16 %v2974
    %v3107 = vunpack.c.l.b16 %v2975
    %v3108 = vunpack.c.l.b16 %v2976
    %v3109 = vunpack.c.l.b16 %v2977
    %v3110 = vunpack.c.l.b16 %v2978
    %v3111 = vunpack.c.l.b16 %v2979
    %v3112 = vunpack.c.l.b16 %v2980
    %v3113 = vunpack.c.l.b16 %v2981
    %v3114 = vunpack.c.l.b16 %v2982
    %v3115 = vunpack.c.l.b16 %v2983
    %v3116 = vunpack.c.l.b16 %v2984
    %v3117 = vunpack.c.l.b16 %v2985
    %v3118 = vunpack.c.l.b16 %v2986
    %v3119 = vunpack.c.l.b16 %v2987
    %v3120 = vunpack.c.l.b16 %v2988
    %v3121 = vunpack.c.l.b16 %v2989
    %v3122 = vunpack.c.l.b16 %v2990
    %v3123 = vunpack.c.l.b16 %v2991
    %v3124 = vunpack.c.l.b16 %v2992
    %v3125 = vunpack.c.l.b16 %v2993
    %v3126 = vunpack.c.l.b16 %v2994
    %v3127 = vunpack.c.l.b16 %v2995
    %v3128 = vunpack.c.l.b16 %v2996
    %v3129 = vunpack.c.l.b16 %v2997
    %v3130 = vunpack.c.l.b16 %v2998
    %v3131 = vunpack.c.l.b16 %v2999
    %v3132 = vunpack.c.l.b16 %v3000
    %v3133 = vunpack.c.l.b16 %v3001
    %v3134 = vunpack.c.l.b16 %v3002
    %v3135 = vunpack.c.l.b16 %v3003
    %v3136 = vunpack.c.l.b16 %v3004
    %v3137 = vunpack.c.l.b16 %v3005
    %v3138 = vunpack.c.l.b16 %v3006
    %v3139 = vunpack.c.l.b16 %v3007
    %v3140 = vunpack.c.l.b16 %v3008
    %v3141 = vunpack.c.l.b16 %v3009
    %v3142 = vunpack.c.l.b16 %v3010
    %v3143 = vunpack.c.l.b16 %v3011
    %v3144 = vunpack.c.l.b16 %v3012
    %v3145 = vunpack.c.l.b16 %v3013
    %v3146 = vunpack.c.l.b16 %v3014
    %v3147 = vunpack.c.l.b16 %v3015
    %v3148 = vunpack.c.l.b16 %v3016
    %v3149 = vunpack.c.l.b16 %v3017
    %v3150 = vunpack.c.l.b16 %v3018
    %v3151 = vunpack.c.l.b16 %v3019
    %v3152 = vunpack.c.l.b16 %v3020
    %v3153 = vunpack.c.l.b16 %v3021
    %v3154 = vunpack.c.l.b16 %v3022
    %v3155 = vunpack.c.l.b16 %v3023
    %v3156 = vunpack.c.l.b16 %v3024
    %v3157 = vunpack.c.l.b16 %v3025
    %v3158 = vunpack.c.l.b16 %v3026
    %v3159 = vunpack.c.l.b16 %v3027
    %v3160 = vpack.c.b16 %v3097, %v3096
    %v3161 = vpack.c.b16 %v3099, %v3098
    %v3162 = vpack.c.b16 %v3101, %v3100
    %v3163 = vpack.c.b16 %v3103, %v3102
    %v3164 = vpack.c.b16 %v3105, %v3104
    %v3165 = vpack.c.b16 %v3107, %v3106
    %v3166 = vpack.c.b16 %v3109, %v3108
    %v3167 = vpack.c.b16 %v3111, %v3110
    %v3168 = vpack.c.b16 %v3113, %v3112
    %v3169 = vpack.c.b16 %v3115, %v3114
    %v3170 = vpack.c.b16 %v3117, %v3116
    %v3171 = vpack.c.b16 %v3119, %v3118
    %v3172 = vpack.c.b16 %v3121, %v3120
    %v3173 = vpack.c.b16 %v3123, %v3122
    %v3174 = vpack.c.b16 %v3125, %v3124
    %v3175 = vpack.c.b16 %v3127, %v3126
    %v3176 = vpack.c.b16 %v3129, %v3128
    %v3177 = vpack.c.b16 %v3131, %v3130
    %v3178 = vpack.c.b16 %v3133, %v3132
    %v3179 = vpack.c.b16 %v3135, %v3134
    %v3180 = vpack.c.b16 %v3137, %v3136
    %v3181 = vpack.c.b16 %v3139, %v3138
    %v3182 = vpack.c.b16 %v3141, %v3140
    %v3183 = vpack.c.b16 %v3143, %v3142
    %v3184 = vpack.c.b16 %v3145, %v3144
    %v3185 = vpack.c.b16 %v3147, %v3146
    %v3186 = vpack.c.b16 %v3149, %v3148
    %v3187 = vpack.c.b16 %v3151, %v3150
    %v3188 = vpack.c.b16 %v3153, %v3152
    %v3189 = vpack.c.b16 %v3155, %v3154
    %v3190 = vpack.c.b16 %v3157, %v3156
    %v3191 = vpack.c.b16 %v3159, %v3158
    %3224 = vmatpush.bf16.msra.mxu0 %v3167
    %3225 = vmatpush.bf16.msra.mxu0 %v3166
    %3226 = vmatpush.bf16.msra.mxu0 %v3165
    %3227 = vmatpush.bf16.msra.mxu0 %v3164
    %3228 = vmatpush.bf16.msra.mxu0 %v3163
    %3229 = vmatpush.bf16.msra.mxu0 %v3162
    %3230 = vmatpush.bf16.msra.mxu0 %v3161
    %3231 = vmatpush.bf16.msra.mxu0 %v3160
    %3232 = vmatmul.bf16.gmra.mxu0 %v2960
    %v3233 = vpop.f32.mrf.mxu0
    %v3234 = vadd.f32 %v3030, %v3233
    %v3235 = vpop.f32.mrf.mxu0
    %v3236 = vadd.f32 %v3030, %v3235
    %3237 = vdwg.mxu0
    %3238 = vmatpush.bf16.msra.mxu0 %v3175
    %3239 = vmatpush.bf16.msra.mxu0 %v3174
    %3240 = vmatpush.bf16.msra.mxu0 %v3173
    %3241 = vmatpush.bf16.msra.mxu0 %v3172
    %3242 = vmatpush.bf16.msra.mxu0 %v3171
    %3243 = vmatpush.bf16.msra.mxu0 %v3170
    %3244 = vmatpush.bf16.msra.mxu0 %v3169
    %3245 = vmatpush.bf16.msra.mxu0 %v3168
    %3246 = vmatmul.bf16.gmra.mxu0 %v2961
    %v3247 = vpop.f32.mrf.mxu0
    %v3248 = vadd.f32 %v3234, %v3247
    %v3249 = vpop.f32.mrf.mxu0
    %v3250 = vadd.f32 %v3236, %v3249
    %3251 = vdwg.mxu0
    %3252 = vmatpush.bf16.msra.mxu0 %v3183
    %3253 = vmatpush.bf16.msra.mxu0 %v3182
    %3254 = vmatpush.bf16.msra.mxu0 %v3181
    %3255 = vmatpush.bf16.msra.mxu0 %v3180
    %3256 = vmatpush.bf16.msra.mxu0 %v3179
    %3257 = vmatpush.bf16.msra.mxu0 %v3178
    %3258 = vmatpush.bf16.msra.mxu0 %v3177
    %3259 = vmatpush.bf16.msra.mxu0 %v3176
    %3260 = vmatmul.bf16.gmra.mxu0 %v2962
    %v3261 = vpop.f32.mrf.mxu0
    %v3262 = vadd.f32 %v3248, %v3261
    %v3263 = vpop.f32.mrf.mxu0
    %v3264 = vadd.f32 %v3250, %v3263
    %3265 = vdwg.mxu0
    %3266 = vmatpush.bf16.msra.mxu0 %v3191
    %3267 = vmatpush.bf16.msra.mxu0 %v3190
    %3268 = vmatpush.bf16.msra.mxu0 %v3189
    %3269 = vmatpush.bf16.msra.mxu0 %v3188
    %3270 = vmatpush.bf16.msra.mxu0 %v3187
    %3271 = vmatpush.bf16.msra.mxu0 %v3186
    %3272 = vmatpush.bf16.msra.mxu0 %v3185
    %3273 = vmatpush.bf16.msra.mxu0 %v3184
    %3274 = vmatmul.bf16.gmra.mxu0 %v2963
    %v3275 = vpop.f32.mrf.mxu0
    %v3276 = vadd.f32 %v3262, %v3275
    %v3277 = vpop.f32.mrf.mxu0
    %v3278 = vadd.f32 %v3264, %v3277
    %3279 = vdwg.mxu0
    %3280 = vst [vmem:[%s14] sm:$0xff] %v3276
    %3281 = vst [vmem:[%s14 + $0x8] sm:$0xff] %v3278
    // Predicated region
    $region66: #{critic_forward.1} parent=1 // pred_check
      _
    $region67: #{critic_forward.1} parent=1 // pred_check_branch
      %3283 = sbr.rel (0) target = $region69
    $region68: #{critic_forward.1} parent=1 // pred_region
      _
    $region69: #{critic_forward.1} parent=1 // pred_fallthru
      _
    // Predicated region
    $region70: #{critic_forward.1} parent=1 // pred_check
      _
    $region71: #{critic_forward.1} parent=1 // pred_check_branch
      %3285 = sbr.rel (0) target = $region73
    $region72: #{critic_forward.1} parent=1 // pred_region
      _
    $region73: #{critic_forward.1} parent=1 // pred_fallthru
      _
    %3286 = vsyncpa [#allocation3], 1
    %3287 = vsyncpa [#allocation5], 1

</llo_original>
